<compile_context>
chip_gen: v5e
topology: v5e:2x2
jax: 0.10.0
libtpu: 0.0.40
codegen_flags: <defaults>
</compile_context>

<pallas_src>
import jax
import jax.numpy as jnp
from jax.experimental import pallas as pl
from jax.experimental.pallas import tpu as pltpu


# ---------------------------------------------------------------------------
# Per-generation VMEM budget (≈60% of physical: ~76 MiB v5e/v6e, ~38 MiB v7x)
# ---------------------------------------------------------------------------
def _vmem_limit_bytes():
    try:
        cap = int(pltpu.get_tpu_info().vmem_capacity_bytes)
    except Exception:
        cap = 64 * 1024 * 1024          # conservative (v7x physical) fallback
    return int(cap * 0.6)


_VMEM_LIMIT = _vmem_limit_bytes()
_TILE_BUDGET = _VMEM_LIMIT // 2         # leave headroom for internal scratch


def _spectral_tiles(D, L, budget_bytes):
    """Pick (TD, TL) for a stacked-(re,im) (1,2,TD,TL) f32 block.

    3 streams (Y-in, PSF-in, X-out) x 2 buffers x 2 (re/im) x 4 B = 48 B/elem.
    """
    per_elem = 48
    TL = None
    for t in (8192, 4096, 2048, 1024, 512, 256, 128):
        if t <= L and L % t == 0 and per_elem * min(D, 8) * t <= budget_bytes:
            TL = t
            break
    if TL is None:
        TL = L                           # full extent: always a legal block dim
    cand = [D] + [t for t in (1024, 512, 256, 128, 64, 32, 16, 8)
                  if t < D and D % t == 0]
    TD = None
    for t in cand:                       # descending; prefer full D
        if per_elem * t * TL <= budget_bytes:
            TD = t
            break
    if TD is None:
        TD = cand[-1]
    return TD, TL


def _neural_row_tile(R, budget_bytes, lanes):
    """Largest row tile (multiple of 8) dividing R that fits in/out double-buffers."""
    per_row = 2 * 2 * lanes * 4          # in + out, double-buffered, f32
    for t in (2048, 1024, 512, 256, 128, 64, 32, 16, 8):
        if t <= R and R % t == 0 and per_row * t <= budget_bytes:
            return t
    return R                             # full extent: legal block dim


# ---------------------------------------------------------------------------
# Kernel 1: frequency-domain inverse filtering  X = Y * invpsf  (complex mul)
#   stacked layout (B, 2, D, L): re/im in one slab, D on sublanes, bins on lanes.
# ---------------------------------------------------------------------------
def _cmul_kernel(y_ref, p_ref, x_ref):
    yr = y_ref[0, 0]
    yi = y_ref[0, 1]
    pr = p_ref[0, 0]
    pi = p_ref[0, 1]
    x_ref[0, 0] = yr * pr - yi * pi
    x_ref[0, 1] = yr * pi + yi * pr


def spectral_deconv(ys, ps):
    """ys: (B, 2, D, L) f32 stacked re/im spectrum; ps: (1, 2, D, L) f32 PSF."""
    B, _, D, L = ys.shape
    TD, TL = _spectral_tiles(D, L, _TILE_BUDGET)
    # Batch innermost: PSF block index constant across consecutive steps -> its
    # re-DMA is elided and the kernel streams only Y-in + X-out per step.
    grid = (pl.cdiv(D, TD), pl.cdiv(L, TL), B)
    y_spec = pl.BlockSpec((1, 2, TD, TL), lambda d, j, b: (b, 0, d, j))
    p_spec = pl.BlockSpec((1, 2, TD, TL), lambda d, j, b: (0, 0, d, j))
    return pl.pallas_call(
        _cmul_kernel,
        out_shape=jax.ShapeDtypeStruct((B, 2, D, L), jnp.float32),
        grid_spec=pltpu.PrefetchScalarGridSpec(
            num_scalar_prefetch=0,
            grid=grid,
            in_specs=[y_spec, p_spec],
            out_specs=y_spec),
        compiler_params=pltpu.CompilerParams(
            dimension_semantics=("parallel", "parallel", "arbitrary"),
            vmem_limit_bytes=_VMEM_LIMIT),
    )(ys, ps)


# ---------------------------------------------------------------------------
# Kernel 2: fused  relu(x) * scale -> 1x1x1 conv -> ReLU -> 1x1x1 conv
#   specialized cin==1/cout==1; voxels as sublane-dense (TR, 128) tiles;
#   weights + scale live in SMEM, hidden loop keeps a single running accumulator.
# ---------------------------------------------------------------------------
def _neural_kernel(x_ref, scale_ref, w1_ref, b1_ref, w2_ref, b2_ref, o_ref):
    hidden = w1_ref.shape[0]
    # relu is the tail of Physics.inverse*, scale is applied after (reference order)
    x = jnp.maximum(x_ref[0], 0.0) * scale_ref[0]               # (TR, 128)
    acc = jnp.zeros_like(x)
    for j in range(hidden):                                     # static; hidden small
        acc = acc + w2_ref[j] * jnp.maximum(w1_ref[j] * x + b1_ref[j], 0.0)
    o_ref[0] = acc + b2_ref[0]


def neural_apply(xr, scale1, w1, b1, w2, b2):
    """xr: (N, R, 128) f32 voxel tiles; scale1/w1/b1/w2/b2: small f32 vectors."""
    N, R, LN = xr.shape
    TR = _neural_row_tile(R, _TILE_BUDGET, LN)
    grid = (N, pl.cdiv(R, TR))
    x_spec = pl.BlockSpec((1, TR, LN), lambda n, r: (n, r, 0))
    smem = pl.BlockSpec(memory_space=pltpu.MemorySpace.SMEM)
    return pl.pallas_call(
        _neural_kernel,
        out_shape=jax.ShapeDtypeStruct((N, R, LN), jnp.float32),
        grid_spec=pltpu.PrefetchScalarGridSpec(
            num_scalar_prefetch=0,
            grid=grid,
            in_specs=[x_spec, smem, smem, smem, smem, smem],
            out_specs=x_spec),
        compiler_params=pltpu.CompilerParams(
            dimension_semantics=("parallel", "parallel"),
            vmem_limit_bytes=_VMEM_LIMIT),
    )(xr, scale1, w1, b1, w2, b2)


# ---------------------------------------------------------------------------
# VSmodel.forward
# ---------------------------------------------------------------------------
def vsmodel_forward(y, invpsf, params, scale):
    """y: [N, C, D, H, W] f32 (NCDHW); invpsf: [D, H, W] complex64 (from a real PSF)."""
    N, C, D, H, W = y.shape
    assert C == 1, "neural stand-in is specialized for cin == 1"
    B = N * C
    Wr = W // 2 + 1
    Lr = H * Wr

    # --- InverseNet: real-FFT-domain deconvolution (LCT inverse) ------------
    # NOTE: real(ifftn(Y * invpsf)) == irfftn(Y_half * invpsf_half) because both
    # spectra are Hermitian-symmetric (y real, invpsf derived from a real psf).
    Y = jnp.fft.rfftn(y, axes=(2, 3, 4))                        # plain-JAX FFT glue
    Ys = jnp.stack([jnp.real(Y), jnp.imag(Y)], axis=2)          # (N,C,2,D,H,Wr)
    Ys = Ys.reshape(B, 2, D, Lr).astype(jnp.float32)
    ph = invpsf[..., :Wr].reshape(D, Lr)                        # half-spectrum PSF
    Ps = jnp.stack([jnp.real(ph), jnp.imag(ph)], axis=0)[None].astype(jnp.float32)

    # pad lane dim to a multiple of 128 for lane-dense, unmasked stores
    Lpad = ((Lr + 127) // 128) * 128
    if Lpad != Lr:
        pad = ((0, 0), (0, 0), (0, 0), (0, Lpad - Lr))
        Ys = jnp.pad(Ys, pad)
        Ps = jnp.pad(Ps, pad)

    Xs = spectral_deconv(Ys, Ps)                                # Pallas, stacked re/im
    Xs = Xs[..., :Lr]
    Xc = jax.lax.complex(Xs[:, 0], Xs[:, 1]).reshape(N, C, D, H, Wr)
    x = jnp.fft.irfftn(Xc, s=(D, H, W), axes=(2, 3, 4)).astype(jnp.float32)

    # --- relu, * scale, Neural (1x1x1 conv3d stack) fused in Pallas ----------
    M = D * H * W
    Mpad = ((M + 127) // 128) * 128
    xf = x.reshape(N, M)
    if Mpad != M:
        xf = jnp.pad(xf, ((0, 0), (0, Mpad - M)))
    LN = 128
    xr = xf.reshape(N, Mpad // LN, LN)                          # sublane-dense voxel tiles

    scale1 = jnp.asarray(scale, jnp.float32).reshape(1)         # traced scalar -> SMEM
    o = neural_apply(xr, scale1, params["w1"], params["b1"],
                     params["w2"], params["b2"])
    o = o.reshape(N, Mpad)[:, :M]
    return o.reshape(N, 1, D, H, W)                             # NCDHW, cout = 1


# ---------------------------------------------------------------------------
# Pure-JAX reference (original fftn-based semantics) for validation
# ---------------------------------------------------------------------------
def reference_forward(y, invpsf, params, scale):
    N, C, D, H, W = y.shape
    Y = jnp.fft.fftn(y, axes=(2, 3, 4))
    x = jnp.real(jnp.fft.ifftn(Y * invpsf[None, None], axes=(2, 3, 4)))
    x = jnp.maximum(x, 0.0).astype(jnp.float32) * scale
    xf = x.reshape(N, -1)
    w1, b1, w2, b2 = params["w1"], params["b1"], params["w2"], params["b2"]
    h = jnp.maximum(w1[None, :, None] * xf[:, None, :] + b1[None, :, None], 0.0)
    o = jnp.sum(w2[None, :, None] * h, axis=1) + b2[0]
    return o.reshape(N, 1, D, H, W)


# ---------------------------------------------------------------------------
if __name__ == "__main__":
    key = jax.random.PRNGKey(0)
    k_y, k_psf, k_w1, k_b1, k_w2, k_b2 = jax.random.split(key, 6)

    # Small shapes consistent with the 3D LCT volume: N=2, C=1, D=8, H=W=16
    N, C, D, H, W = 2, 1, 8, 16, 16
    hidden = 32
    scale = 1.5      # cfg['model']['scale']
    snr = 100.0

    y = jax.random.normal(k_y, (N, C, D, H, W), dtype=jnp.float32)

    # Synthetic real PSF -> fpsf -> Wiener-style invpsf (mirrors Physics.inverse_snr)
    psf = jax.random.normal(k_psf, (D, H, W), dtype=jnp.float32) * 0.1
    psf = psf.at[0, 0, 0].add(1.0)                              # delta + noise
    fpsf = jnp.fft.fftn(psf)
    invpsf = jnp.conj(fpsf) / (1.0 / snr
                               + jnp.real(fpsf) ** 2 + jnp.imag(fpsf) ** 2)

    # Deterministic 1x1x1-conv3d parameters (stand-in for unet3d_atte), cin=cout=1.
    params = {
        "w1": jax.random.normal(k_w1, (hidden,), dtype=jnp.float32) * 0.1,
        "b1": jax.random.normal(k_b1, (hidden,), dtype=jnp.float32) * 0.01,
        "w2": jax.random.normal(k_w2, (hidden,), dtype=jnp.float32) * 0.1,
        "b2": jax.random.normal(k_b2, (1,), dtype=jnp.float32) * 0.01,
    }

    out = jax.jit(vsmodel_forward)(y, invpsf, params, jnp.float32(scale))
    jax.block_until_ready(out)
    assert out.shape == (N, 1, D, H, W)

    ref = reference_forward(y, invpsf, params, scale)
    err = float(jnp.max(jnp.abs(out - ref)))
    assert jnp.allclose(out, ref, atol=1e-3, rtol=1e-3), f"max abs err {err}"

    print("KERNEL_OK")
</pallas_src>

<mosaic_0001>
module attributes {stable_mosaic.version = 11 : i64} {
  func.func @_cmul_kernel(%arg0: i32, %arg1: i32, %arg2: i32, %arg3: memref<1x2x8x256xf32, #tpu.memory_space<vmem>>, %arg4: memref<1x2x8x256xf32, #tpu.memory_space<vmem>>, %arg5: memref<1x2x8x256xf32, #tpu.memory_space<vmem>>) attributes {dimension_semantics = [#tpu.dimension_semantics<parallel>, #tpu.dimension_semantics<parallel>, #tpu.dimension_semantics<arbitrary>], iteration_bounds = array<i64: 1, 1, 2>, scalar_prefetch = 0 : i64, scratch_operands = 0 : i64, tpu.core_type = #tpu.core_type<tc>, window_params = [{transform_indices = @transform_0, window_bounds = array<i64: 1, 2, 8, 256>}, {transform_indices = @transform_1, window_bounds = array<i64: 1, 2, 8, 256>}, {transform_indices = @transform_2, window_bounds = array<i64: 1, 2, 8, 256>}]} {
    %c0 = arith.constant 0 : index
    %c0_0 = arith.constant 0 : index
    %c0_1 = arith.constant 0 : index
    %c0_2 = arith.constant 0 : index
    %0 = vector.load %arg3[%c0, %c0_0, %c0_1, %c0_2] : memref<1x2x8x256xf32, #tpu.memory_space<vmem>>, vector<1x1x8x256xf32>
    %1 = vector.shape_cast %0 : vector<1x1x8x256xf32> to vector<8x256xf32>
    %c0_3 = arith.constant 0 : index
    %c1 = arith.constant 1 : index
    %c0_4 = arith.constant 0 : index
    %c0_5 = arith.constant 0 : index
    %2 = vector.load %arg3[%c0_3, %c1, %c0_4, %c0_5] : memref<1x2x8x256xf32, #tpu.memory_space<vmem>>, vector<1x1x8x256xf32>
    %3 = vector.shape_cast %2 : vector<1x1x8x256xf32> to vector<8x256xf32>
    %c0_6 = arith.constant 0 : index
    %c0_7 = arith.constant 0 : index
    %c0_8 = arith.constant 0 : index
    %c0_9 = arith.constant 0 : index
    %4 = vector.load %arg4[%c0_6, %c0_7, %c0_8, %c0_9] : memref<1x2x8x256xf32, #tpu.memory_space<vmem>>, vector<1x1x8x256xf32>
    %5 = vector.shape_cast %4 : vector<1x1x8x256xf32> to vector<8x256xf32>
    %c0_10 = arith.constant 0 : index
    %c1_11 = arith.constant 1 : index
    %c0_12 = arith.constant 0 : index
    %c0_13 = arith.constant 0 : index
    %6 = vector.load %arg4[%c0_10, %c1_11, %c0_12, %c0_13] : memref<1x2x8x256xf32, #tpu.memory_space<vmem>>, vector<1x1x8x256xf32>
    %7 = vector.shape_cast %6 : vector<1x1x8x256xf32> to vector<8x256xf32>
    %8 = arith.mulf %1, %5 : vector<8x256xf32>
    %9 = arith.mulf %3, %7 : vector<8x256xf32>
    %10 = arith.subf %8, %9 : vector<8x256xf32>
    %c0_14 = arith.constant 0 : index
    %c0_15 = arith.constant 0 : index
    %c0_16 = arith.constant 0 : index
    %c0_17 = arith.constant 0 : index
    %11 = vector.load %arg5[%c0_14, %c0_15, %c0_16, %c0_17] : memref<1x2x8x256xf32, #tpu.memory_space<vmem>>, vector<1x1x8x256xf32>
    %12 = vector.shape_cast %11 : vector<1x1x8x256xf32> to vector<8x256xf32>
    %13 = vector.shape_cast %10 : vector<8x256xf32> to vector<1x1x8x256xf32>
    tpu.vector_store %arg5[%c0_14, %c0_15, %c0_16, %c0_17], %13 {strides = array<i32>} : memref<1x2x8x256xf32, #tpu.memory_space<vmem>>, vector<1x1x8x256xf32>,
    %14 = arith.mulf %1, %7 : vector<8x256xf32>
    %15 = arith.mulf %3, %5 : vector<8x256xf32>
    %16 = arith.addf %14, %15 : vector<8x256xf32>
    %c0_18 = arith.constant 0 : index
    %c1_19 = arith.constant 1 : index
    %c0_20 = arith.constant 0 : index
    %c0_21 = arith.constant 0 : index
    %17 = vector.load %arg5[%c0_18, %c1_19, %c0_20, %c0_21] : memref<1x2x8x256xf32, #tpu.memory_space<vmem>>, vector<1x1x8x256xf32>
    %18 = vector.shape_cast %17 : vector<1x1x8x256xf32> to vector<8x256xf32>
    %19 = vector.shape_cast %16 : vector<8x256xf32> to vector<1x1x8x256xf32>
    tpu.vector_store %arg5[%c0_18, %c1_19, %c0_20, %c0_21], %19 {strides = array<i32>} : memref<1x2x8x256xf32, #tpu.memory_space<vmem>>, vector<1x1x8x256xf32>,
    return
  }
  func.func @transform_0(%arg0: i32, %arg1: i32, %arg2: i32) -> (i32, i32, i32, i32) {
    %c0_i32 = arith.constant 0 : i32
    %c0_i32_0 = arith.constant 0 : i32
    return %arg2, %c0_i32, %arg0, %arg1 : i32, i32, i32, i32
  }
  func.func @transform_1(%arg0: i32, %arg1: i32, %arg2: i32) -> (i32, i32, i32, i32) {
    %c0_i32 = arith.constant 0 : i32
    %c0_i32_0 = arith.constant 0 : i32
    %c0_i32_1 = arith.constant 0 : i32
    return %c0_i32, %c0_i32_0, %arg0, %arg1 : i32, i32, i32, i32
  }
  func.func @transform_2(%arg0: i32, %arg1: i32, %arg2: i32) -> (i32, i32, i32, i32) {
    %c0_i32 = arith.constant 0 : i32
    %c0_i32_0 = arith.constant 0 : i32
    return %arg2, %c0_i32, %arg0, %arg1 : i32, i32, i32, i32
  }
}

module attributes {stable_mosaic.version = 11 : i64} {
  func.func @_neural_kernel(%arg0: i32, %arg1: i32, %arg2: memref<1x16x128xf32, #tpu.memory_space<vmem>>, %arg3: memref<1xf32, #tpu.memory_space<smem>>, %arg4: memref<32xf32, #tpu.memory_space<smem>>, %arg5: memref<32xf32, #tpu.memory_space<smem>>, %arg6: memref<32xf32, #tpu.memory_space<smem>>, %arg7: memref<1xf32, #tpu.memory_space<smem>>, %arg8: memref<1x16x128xf32, #tpu.memory_space<vmem>>) attributes {dimension_semantics = [#tpu.dimension_semantics<parallel>, #tpu.dimension_semantics<parallel>], iteration_bounds = array<i64: 2, 1>, scalar_prefetch = 0 : i64, scratch_operands = 0 : i64, tpu.core_type = #tpu.core_type<tc>, window_params = [{transform_indices = @transform_0, window_bounds = array<i64: 1, 16, 128>}, {transform_indices = @transform_1, window_bounds = array<i64: 1>}, {transform_indices = @transform_2, window_bounds = array<i64: 32>}, {transform_indices = @transform_3, window_bounds = array<i64: 32>}, {transform_indices = @transform_4, window_bounds = array<i64: 32>}, {transform_indices = @transform_5, window_bounds = array<i64: 1>}, {transform_indices = @transform_6, window_bounds = array<i64: 1, 16, 128>}]} {
    %c0 = arith.constant 0 : index
    %c0_0 = arith.constant 0 : index
    %c0_1 = arith.constant 0 : index
    %0 = vector.load %arg2[%c0, %c0_0, %c0_1] : memref<1x16x128xf32, #tpu.memory_space<vmem>>, vector<1x16x128xf32>
    %1 = vector.shape_cast %0 : vector<1x16x128xf32> to vector<16x128xf32>
    %cst = arith.constant 0.000000e+00 : f32
    %2 = vector.broadcast %cst : f32 to vector<16x128xf32>
    %3 = arith.maximumf %1, %2 : vector<16x128xf32>
    %c0_2 = arith.constant 0 : index
    %4 = memref.load %arg3[%c0_2] : memref<1xf32, #tpu.memory_space<smem>>
    %5 = vector.broadcast %4 : f32 to vector<16x128xf32>
    %6 = arith.mulf %3, %5 : vector<16x128xf32>
    %cst_3 = arith.constant 0.000000e+00 : f32
    %7 = vector.broadcast %cst_3 : f32 to vector<16x128xf32>
    %c0_4 = arith.constant 0 : index
    %8 = memref.load %arg6[%c0_4] : memref<32xf32, #tpu.memory_space<smem>>
    %c0_5 = arith.constant 0 : index
    %9 = memref.load %arg4[%c0_5] : memref<32xf32, #tpu.memory_space<smem>>
    %10 = vector.broadcast %9 : f32 to vector<16x128xf32>
    %11 = arith.mulf %10, %6 : vector<16x128xf32>
    %c0_6 = arith.constant 0 : index
    %12 = memref.load %arg5[%c0_6] : memref<32xf32, #tpu.memory_space<smem>>
    %13 = vector.broadcast %12 : f32 to vector<16x128xf32>
    %14 = arith.addf %11, %13 : vector<16x128xf32>
    %cst_7 = arith.constant 0.000000e+00 : f32
    %15 = vector.broadcast %cst_7 : f32 to vector<16x128xf32>
    %16 = arith.maximumf %14, %15 : vector<16x128xf32>
    %17 = vector.broadcast %8 : f32 to vector<16x128xf32>
    %18 = arith.mulf %17, %16 : vector<16x128xf32>
    %19 = arith.addf %7, %18 : vector<16x128xf32>
    %c1 = arith.constant 1 : index
    %20 = memref.load %arg6[%c1] : memref<32xf32, #tpu.memory_space<smem>>
    %c1_8 = arith.constant 1 : index
    %21 = memref.load %arg4[%c1_8] : memref<32xf32, #tpu.memory_space<smem>>
    %22 = vector.broadcast %21 : f32 to vector<16x128xf32>
    %23 = arith.mulf %22, %6 : vector<16x128xf32>
    %c1_9 = arith.constant 1 : index
    %24 = memref.load %arg5[%c1_9] : memref<32xf32, #tpu.memory_space<smem>>
    %25 = vector.broadcast %24 : f32 to vector<16x128xf32>
    %26 = arith.addf %23, %25 : vector<16x128xf32>
    %cst_10 = arith.constant 0.000000e+00 : f32
    %27 = vector.broadcast %cst_10 : f32 to vector<16x128xf32>
    %28 = arith.maximumf %26, %27 : vector<16x128xf32>
    %29 = vector.broadcast %20 : f32 to vector<16x128xf32>
    %30 = arith.mulf %29, %28 : vector<16x128xf32>
    %31 = arith.addf %19, %30 : vector<16x128xf32>
    %c2 = arith.constant 2 : index
    %32 = memref.load %arg6[%c2] : memref<32xf32, #tpu.memory_space<smem>>
    %c2_11 = arith.constant 2 : index
    %33 = memref.load %arg4[%c2_11] : memref<32xf32, #tpu.memory_space<smem>>
    %34 = vector.broadcast %33 : f32 to vector<16x128xf32>
    %35 = arith.mulf %34, %6 : vector<16x128xf32>
    %c2_12 = arith.constant 2 : index
    %36 = memref.load %arg5[%c2_12] : memref<32xf32, #tpu.memory_space<smem>>
    %37 = vector.broadcast %36 : f32 to vector<16x128xf32>
    %38 = arith.addf %35, %37 : vector<16x128xf32>
    %cst_13 = arith.constant 0.000000e+00 : f32
    %39 = vector.broadcast %cst_13 : f32 to vector<16x128xf32>
    %40 = arith.maximumf %38, %39 : vector<16x128xf32>
    %41 = vector.broadcast %32 : f32 to vector<16x128xf32>
    %42 = arith.mulf %41, %40 : vector<16x128xf32>
    %43 = arith.addf %31, %42 : vector<16x128xf32>
    %c3 = arith.constant 3 : index
    %44 = memref.load %arg6[%c3] : memref<32xf32, #tpu.memory_space<smem>>
    %c3_14 = arith.constant 3 : index
    %45 = memref.load %arg4[%c3_14] : memref<32xf32, #tpu.memory_space<smem>>
    %46 = vector.broadcast %45 : f32 to vector<16x128xf32>
    %47 = arith.mulf %46, %6 : vector<16x128xf32>
    %c3_15 = arith.constant 3 : index
    %48 = memref.load %arg5[%c3_15] : memref<32xf32, #tpu.memory_space<smem>>
    %49 = vector.broadcast %48 : f32 to vector<16x128xf32>
    %50 = arith.addf %47, %49 : vector<16x128xf32>
    %cst_16 = arith.constant 0.000000e+00 : f32
    %51 = vector.broadcast %cst_16 : f32 to vector<16x128xf32>
    %52 = arith.maximumf %50, %51 : vector<16x128xf32>
    %53 = vector.broadcast %44 : f32 to vector<16x128xf32>
    %54 = arith.mulf %53, %52 : vector<16x128xf32>
    %55 = arith.addf %43, %54 : vector<16x128xf32>
    %c4 = arith.constant 4 : index
    %56 = memref.load %arg6[%c4] : memref<32xf32, #tpu.memory_space<smem>>
    %c4_17 = arith.constant 4 : index
    %57 = memref.load %arg4[%c4_17] : memref<32xf32, #tpu.memory_space<smem>>
    %58 = vector.broadcast %57 : f32 to vector<16x128xf32>
    %59 = arith.mulf %58, %6 : vector<16x128xf32>
    %c4_18 = arith.constant 4 : index
    %60 = memref.load %arg5[%c4_18] : memref<32xf32, #tpu.memory_space<smem>>
    %61 = vector.broadcast %60 : f32 to vector<16x128xf32>
    %62 = arith.addf %59, %61 : vector<16x128xf32>
    %cst_19 = arith.constant 0.000000e+00 : f32
    %63 = vector.broadcast %cst_19 : f32 to vector<16x128xf32>
    %64 = arith.maximumf %62, %63 : vector<16x128xf32>
    %65 = vector.broadcast %56 : f32 to vector<16x128xf32>
    %66 = arith.mulf %65, %64 : vector<16x128xf32>
    %67 = arith.addf %55, %66 : vector<16x128xf32>
    %c5 = arith.constant 5 : index
    %68 = memref.load %arg6[%c5] : memref<32xf32, #tpu.memory_space<smem>>
    %c5_20 = arith.constant 5 : index
    %69 = memref.load %arg4[%c5_20] : memref<32xf32, #tpu.memory_space<smem>>
    %70 = vector.broadcast %69 : f32 to vector<16x128xf32>
    %71 = arith.mulf %70, %6 : vector<16x128xf32>
    %c5_21 = arith.constant 5 : index
    %72 = memref.load %arg5[%c5_21] : memref<32xf32, #tpu.memory_space<smem>>
    %73 = vector.broadcast %72 : f32 to vector<16x128xf32>
    %74 = arith.addf %71, %73 : vector<16x128xf32>
    %cst_22 = arith.constant 0.000000e+00 : f32
    %75 = vector.broadcast %cst_22 : f32 to vector<16x128xf32>
    %76 = arith.maximumf %74, %75 : vector<16x128xf32>
    %77 = vector.broadcast %68 : f32 to vector<16x128xf32>
    %78 = arith.mulf %77, %76 : vector<16x128xf32>
    %79 = arith.addf %67, %78 : vector<16x128xf32>
    %c6 = arith.constant 6 : index
    %80 = memref.load %arg6[%c6] : memref<32xf32, #tpu.memory_space<smem>>
    %c6_23 = arith.constant 6 : index
    %81 = memref.load %arg4[%c6_23] : memref<32xf32, #tpu.memory_space<smem>>
    %82 = vector.broadcast %81 : f32 to vector<16x128xf32>
    %83 = arith.mulf %82, %6 : vector<16x128xf32>
    %c6_24 = arith.constant 6 : index
    %84 = memref.load %arg5[%c6_24] : memref<32xf32, #tpu.memory_space<smem>>
    %85 = vector.broadcast %84 : f32 to vector<16x128xf32>
    %86 = arith.addf %83, %85 : vector<16x128xf32>
    %cst_25 = arith.constant 0.000000e+00 : f32
    %87 = vector.broadcast %cst_25 : f32 to vector<16x128xf32>
    %88 = arith.maximumf %86, %87 : vector<16x128xf32>
    %89 = vector.broadcast %80 : f32 to vector<16x128xf32>
    %90 = arith.mulf %89, %88 : vector<16x128xf32>
    %91 = arith.addf %79, %90 : vector<16x128xf32>
    %c7 = arith.constant 7 : index
    %92 = memref.load %arg6[%c7] : memref<32xf32, #tpu.memory_space<smem>>
    %c7_26 = arith.constant 7 : index
    %93 = memref.load %arg4[%c7_26] : memref<32xf32, #tpu.memory_space<smem>>
    %94 = vector.broadcast %93 : f32 to vector<16x128xf32>
    %95 = arith.mulf %94, %6 : vector<16x128xf32>
    %c7_27 = arith.constant 7 : index
    %96 = memref.load %arg5[%c7_27] : memref<32xf32, #tpu.memory_space<smem>>
    %97 = vector.broadcast %96 : f32 to vector<16x128xf32>
    %98 = arith.addf %95, %97 : vector<16x128xf32>
    %cst_28 = arith.constant 0.000000e+00 : f32
    %99 = vector.broadcast %cst_28 : f32 to vector<16x128xf32>
    %100 = arith.maximumf %98, %99 : vector<16x128xf32>
    %101 = vector.broadcast %92 : f32 to vector<16x128xf32>
    %102 = arith.mulf %101, %100 : vector<16x128xf32>
    %103 = arith.addf %91, %102 : vector<16x128xf32>
    %c8 = arith.constant 8 : index
    %104 = memref.load %arg6[%c8] : memref<32xf32, #tpu.memory_space<smem>>
    %c8_29 = arith.constant 8 : index
    %105 = memref.load %arg4[%c8_29] : memref<32xf32, #tpu.memory_space<smem>>
    %106 = vector.broadcast %105 : f32 to vector<16x128xf32>
    %107 = arith.mulf %106, %6 : vector<16x128xf32>
    %c8_30 = arith.constant 8 : index
    %108 = memref.load %arg5[%c8_30] : memref<32xf32, #tpu.memory_space<smem>>
    %109 = vector.broadcast %108 : f32 to vector<16x128xf32>
    %110 = arith.addf %107, %109 : vector<16x128xf32>
    %cst_31 = arith.constant 0.000000e+00 : f32
    %111 = vector.broadcast %cst_31 : f32 to vector<16x128xf32>
    %112 = arith.maximumf %110, %111 : vector<16x128xf32>
    %113 = vector.broadcast %104 : f32 to vector<16x128xf32>
    %114 = arith.mulf %113, %112 : vector<16x128xf32>
    %115 = arith.addf %103, %114 : vector<16x128xf32>
    %c9 = arith.constant 9 : index
    %116 = memref.load %arg6[%c9] : memref<32xf32, #tpu.memory_space<smem>>
    %c9_32 = arith.constant 9 : index
    %117 = memref.load %arg4[%c9_32] : memref<32xf32, #tpu.memory_space<smem>>
    %118 = vector.broadcast %117 : f32 to vector<16x128xf32>
    %119 = arith.mulf %118, %6 : vector<16x128xf32>
    %c9_33 = arith.constant 9 : index
    %120 = memref.load %arg5[%c9_33] : memref<32xf32, #tpu.memory_space<smem>>
    %121 = vector.broadcast %120 : f32 to vector<16x128xf32>
    %122 = arith.addf %119, %121 : vector<16x128xf32>
    %cst_34 = arith.constant 0.000000e+00 : f32
    %123 = vector.broadcast %cst_34 : f32 to vector<16x128xf32>
    %124 = arith.maximumf %122, %123 : vector<16x128xf32>
    %125 = vector.broadcast %116 : f32 to vector<16x128xf32>
    %126 = arith.mulf %125, %124 : vector<16x128xf32>
    %127 = arith.addf %115, %126 : vector<16x128xf32>
    %c10 = arith.constant 10 : index
    %128 = memref.load %arg6[%c10] : memref<32xf32, #tpu.memory_space<smem>>
    %c10_35 = arith.constant 10 : index
    %129 = memref.load %arg4[%c10_35] : memref<32xf32, #tpu.memory_space<smem>>
    %130 = vector.broadcast %129 : f32 to vector<16x128xf32>
    %131 = arith.mulf %130, %6 : vector<16x128xf32>
    %c10_36 = arith.constant 10 : index
    %132 = memref.load %arg5[%c10_36] : memref<32xf32, #tpu.memory_space<smem>>
    %133 = vector.broadcast %132 : f32 to vector<16x128xf32>
    %134 = arith.addf %131, %133 : vector<16x128xf32>
    %cst_37 = arith.constant 0.000000e+00 : f32
    %135 = vector.broadcast %cst_37 : f32 to vector<16x128xf32>
    %136 = arith.maximumf %134, %135 : vector<16x128xf32>
    %137 = vector.broadcast %128 : f32 to vector<16x128xf32>
    %138 = arith.mulf %137, %136 : vector<16x128xf32>
    %139 = arith.addf %127, %138 : vector<16x128xf32>
    %c11 = arith.constant 11 : index
    %140 = memref.load %arg6[%c11] : memref<32xf32, #tpu.memory_space<smem>>
    %c11_38 = arith.constant 11 : index
    %141 = memref.load %arg4[%c11_38] : memref<32xf32, #tpu.memory_space<smem>>
    %142 = vector.broadcast %141 : f32 to vector<16x128xf32>
    %143 = arith.mulf %142, %6 : vector<16x128xf32>
    %c11_39 = arith.constant 11 : index
    %144 = memref.load %arg5[%c11_39] : memref<32xf32, #tpu.memory_space<smem>>
    %145 = vector.broadcast %144 : f32 to vector<16x128xf32>
    %146 = arith.addf %143, %145 : vector<16x128xf32>
    %cst_40 = arith.constant 0.000000e+00 : f32
    %147 = vector.broadcast %cst_40 : f32 to vector<16x128xf32>
    %148 = arith.maximumf %146, %147 : vector<16x128xf32>
    %149 = vector.broadcast %140 : f32 to vector<16x128xf32>
    %150 = arith.mulf %149, %148 : vector<16x128xf32>
    %151 = arith.addf %139, %150 : vector<16x128xf32>
    %c12 = arith.constant 12 : index
    %152 = memref.load %arg6[%c12] : memref<32xf32, #tpu.memory_space<smem>>
    %c12_41 = arith.constant 12 : index
    %153 = memref.load %arg4[%c12_41] : memref<32xf32, #tpu.memory_space<smem>>
    %154 = vector.broadcast %153 : f32 to vector<16x128xf32>
    %155 = arith.mulf %154, %6 : vector<16x128xf32>
    %c12_42 = arith.constant 12 : index
    %156 = memref.load %arg5[%c12_42] : memref<32xf32, #tpu.memory_space<smem>>
    %157 = vector.broadcast %156 : f32 to vector<16x128xf32>
    %158 = arith.addf %155, %157 : vector<16x128xf32>
    %cst_43 = arith.constant 0.000000e+00 : f32
    %159 = vector.broadcast %cst_43 : f32 to vector<16x128xf32>
    %160 = arith.maximumf %158, %159 : vector<16x128xf32>
    %161 = vector.broadcast %152 : f32 to vector<16x128xf32>
    %162 = arith.mulf %161, %160 : vector<16x128xf32>
    %163 = arith.addf %151, %162 : vector<16x128xf32>
    %c13 = arith.constant 13 : index
    %164 = memref.load %arg6[%c13] : memref<32xf32, #tpu.memory_space<smem>>
    %c13_44 = arith.constant 13 : index
    %165 = memref.load %arg4[%c13_44] : memref<32xf32, #tpu.memory_space<smem>>
    %166 = vector.broadcast %165 : f32 to vector<16x128xf32>
    %167 = arith.mulf %166, %6 : vector<16x128xf32>
    %c13_45 = arith.constant 13 : index
    %168 = memref.load %arg5[%c13_45] : memref<32xf32, #tpu.memory_space<smem>>
    %169 = vector.broadcast %168 : f32 to vector<16x128xf32>
    %170 = arith.addf %167, %169 : vector<16x128xf32>
    %cst_46 = arith.constant 0.000000e+00 : f32
    %171 = vector.broadcast %cst_46 : f32 to vector<16x128xf32>
    %172 = arith.maximumf %170, %171 : vector<16x128xf32>
    %173 = vector.broadcast %164 : f32 to vector<16x128xf32>
    %174 = arith.mulf %173, %172 : vector<16x128xf32>
    %175 = arith.addf %163, %174 : vector<16x128xf32>
    %c14 = arith.constant 14 : index
    %176 = memref.load %arg6[%c14] : memref<32xf32, #tpu.memory_space<smem>>
    %c14_47 = arith.constant 14 : index
    %177 = memref.load %arg4[%c14_47] : memref<32xf32, #tpu.memory_space<smem>>
    %178 = vector.broadcast %177 : f32 to vector<16x128xf32>
    %179 = arith.mulf %178, %6 : vector<16x128xf32>
    %c14_48 = arith.constant 14 : index
    %180 = memref.load %arg5[%c14_48] : memref<32xf32, #tpu.memory_space<smem>>
    %181 = vector.broadcast %180 : f32 to vector<16x128xf32>
    %182 = arith.addf %179, %181 : vector<16x128xf32>
    %cst_49 = arith.constant 0.000000e+00 : f32
    %183 = vector.broadcast %cst_49 : f32 to vector<16x128xf32>
    %184 = arith.maximumf %182, %183 : vector<16x128xf32>
    %185 = vector.broadcast %176 : f32 to vector<16x128xf32>
    %186 = arith.mulf %185, %184 : vector<16x128xf32>
    %187 = arith.addf %175, %186 : vector<16x128xf32>
    %c15 = arith.constant 15 : index
    %188 = memref.load %arg6[%c15] : memref<32xf32, #tpu.memory_space<smem>>
    %c15_50 = arith.constant 15 : index
    %189 = memref.load %arg4[%c15_50] : memref<32xf32, #tpu.memory_space<smem>>
    %190 = vector.broadcast %189 : f32 to vector<16x128xf32>
    %191 = arith.mulf %190, %6 : vector<16x128xf32>
    %c15_51 = arith.constant 15 : index
    %192 = memref.load %arg5[%c15_51] : memref<32xf32, #tpu.memory_space<smem>>
    %193 = vector.broadcast %192 : f32 to vector<16x128xf32>
    %194 = arith.addf %191, %193 : vector<16x128xf32>
    %cst_52 = arith.constant 0.000000e+00 : f32
    %195 = vector.broadcast %cst_52 : f32 to vector<16x128xf32>
    %196 = arith.maximumf %194, %195 : vector<16x128xf32>
    %197 = vector.broadcast %188 : f32 to vector<16x128xf32>
    %198 = arith.mulf %197, %196 : vector<16x128xf32>
    %199 = arith.addf %187, %198 : vector<16x128xf32>
    %c16 = arith.constant 16 : index
    %200 = memref.load %arg6[%c16] : memref<32xf32, #tpu.memory_space<smem>>
    %c16_53 = arith.constant 16 : index
    %201 = memref.load %arg4[%c16_53] : memref<32xf32, #tpu.memory_space<smem>>
    %202 = vector.broadcast %201 : f32 to vector<16x128xf32>
    %203 = arith.mulf %202, %6 : vector<16x128xf32>
    %c16_54 = arith.constant 16 : index
    %204 = memref.load %arg5[%c16_54] : memref<32xf32, #tpu.memory_space<smem>>
    %205 = vector.broadcast %204 : f32 to vector<16x128xf32>
    %206 = arith.addf %203, %205 : vector<16x128xf32>
    %cst_55 = arith.constant 0.000000e+00 : f32
    %207 = vector.broadcast %cst_55 : f32 to vector<16x128xf32>
    %208 = arith.maximumf %206, %207 : vector<16x128xf32>
    %209 = vector.broadcast %200 : f32 to vector<16x128xf32>
    %210 = arith.mulf %209, %208 : vector<16x128xf32>
    %211 = arith.addf %199, %210 : vector<16x128xf32>
    %c17 = arith.constant 17 : index
    %212 = memref.load %arg6[%c17] : memref<32xf32, #tpu.memory_space<smem>>
    %c17_56 = arith.constant 17 : index
    %213 = memref.load %arg4[%c17_56] : memref<32xf32, #tpu.memory_space<smem>>
    %214 = vector.broadcast %213 : f32 to vector<16x128xf32>
    %215 = arith.mulf %214, %6 : vector<16x128xf32>
    %c17_57 = arith.constant 17 : index
    %216 = memref.load %arg5[%c17_57] : memref<32xf32, #tpu.memory_space<smem>>
    %217 = vector.broadcast %216 : f32 to vector<16x128xf32>
    %218 = arith.addf %215, %217 : vector<16x128xf32>
    %cst_58 = arith.constant 0.000000e+00 : f32
    %219 = vector.broadcast %cst_58 : f32 to vector<16x128xf32>
    %220 = arith.maximumf %218, %219 : vector<16x128xf32>
    %221 = vector.broadcast %212 : f32 to vector<16x128xf32>
    %222 = arith.mulf %221, %220 : vector<16x128xf32>
    %223 = arith.addf %211, %222 : vector<16x128xf32>
    %c18 = arith.constant 18 : index
    %224 = memref.load %arg6[%c18] : memref<32xf32, #tpu.memory_space<smem>>
    %c18_59 = arith.constant 18 : index
    %225 = memref.load %arg4[%c18_59] : memref<32xf32, #tpu.memory_space<smem>>
    %226 = vector.broadcast %225 : f32 to vector<16x128xf32>
    %227 = arith.mulf %226, %6 : vector<16x128xf32>
    %c18_60 = arith.constant 18 : index
    %228 = memref.load %arg5[%c18_60] : memref<32xf32, #tpu.memory_space<smem>>
    %229 = vector.broadcast %228 : f32 to vector<16x128xf32>
    %230 = arith.addf %227, %229 : vector<16x128xf32>
    %cst_61 = arith.constant 0.000000e+00 : f32
    %231 = vector.broadcast %cst_61 : f32 to vector<16x128xf32>
    %232 = arith.maximumf %230, %231 : vector<16x128xf32>
    %233 = vector.broadcast %224 : f32 to vector<16x128xf32>
    %234 = arith.mulf %233, %232 : vector<16x128xf32>
    %235 = arith.addf %223, %234 : vector<16x128xf32>
    %c19 = arith.constant 19 : index
    %236 = memref.load %arg6[%c19] : memref<32xf32, #tpu.memory_space<smem>>
    %c19_62 = arith.constant 19 : index
    %237 = memref.load %arg4[%c19_62] : memref<32xf32, #tpu.memory_space<smem>>
    %238 = vector.broadcast %237 : f32 to vector<16x128xf32>
    %239 = arith.mulf %238, %6 : vector<16x128xf32>
    %c19_63 = arith.constant 19 : index
    %240 = memref.load %arg5[%c19_63] : memref<32xf32, #tpu.memory_space<smem>>
    %241 = vector.broadcast %240 : f32 to vector<16x128xf32>
    %242 = arith.addf %239, %241 : vector<16x128xf32>
    %cst_64 = arith.constant 0.000000e+00 : f32
    %243 = vector.broadcast %cst_64 : f32 to vector<16x128xf32>
    %244 = arith.maximumf %242, %243 : vector<16x128xf32>
    %245 = vector.broadcast %236 : f32 to vector<16x128xf32>
    %246 = arith.mulf %245, %244 : vector<16x128xf32>
    %247 = arith.addf %235, %246 : vector<16x128xf32>
    %c20 = arith.constant 20 : index
    %248 = memref.load %arg6[%c20] : memref<32xf32, #tpu.memory_space<smem>>
    %c20_65 = arith.constant 20 : index
    %249 = memref.load %arg4[%c20_65] : memref<32xf32, #tpu.memory_space<smem>>
    %250 = vector.broadcast %249 : f32 to vector<16x128xf32>
    %251 = arith.mulf %250, %6 : vector<16x128xf32>
    %c20_66 = arith.constant 20 : index
    %252 = memref.load %arg5[%c20_66] : memref<32xf32, #tpu.memory_space<smem>>
    %253 = vector.broadcast %252 : f32 to vector<16x128xf32>
    %254 = arith.addf %251, %253 : vector<16x128xf32>
    %cst_67 = arith.constant 0.000000e+00 : f32
    %255 = vector.broadcast %cst_67 : f32 to vector<16x128xf32>
    %256 = arith.maximumf %254, %255 : vector<16x128xf32>
    %257 = vector.broadcast %248 : f32 to vector<16x128xf32>
    %258 = arith.mulf %257, %256 : vector<16x128xf32>
    %259 = arith.addf %247, %258 : vector<16x128xf32>
    %c21 = arith.constant 21 : index
    %260 = memref.load %arg6[%c21] : memref<32xf32, #tpu.memory_space<smem>>
    %c21_68 = arith.constant 21 : index
    %261 = memref.load %arg4[%c21_68] : memref<32xf32, #tpu.memory_space<smem>>
    %262 = vector.broadcast %261 : f32 to vector<16x128xf32>
    %263 = arith.mulf %262, %6 : vector<16x128xf32>
    %c21_69 = arith.constant 21 : index
    %264 = memref.load %arg5[%c21_69] : memref<32xf32, #tpu.memory_space<smem>>
    %265 = vector.broadcast %264 : f32 to vector<16x128xf32>
    %266 = arith.addf %263, %265 : vector<16x128xf32>
    %cst_70 = arith.constant 0.000000e+00 : f32
    %267 = vector.broadcast %cst_70 : f32 to vector<16x128xf32>
    %268 = arith.maximumf %266, %267 : vector<16x128xf32>
    %269 = vector.broadcast %260 : f32 to vector<16x128xf32>
    %270 = arith.mulf %269, %268 : vector<16x128xf32>
    %271 = arith.addf %259, %270 : vector<16x128xf32>
    %c22 = arith.constant 22 : index
    %272 = memref.load %arg6[%c22] : memref<32xf32, #tpu.memory_space<smem>>
    %c22_71 = arith.constant 22 : index
    %273 = memref.load %arg4[%c22_71] : memref<32xf32, #tpu.memory_space<smem>>
    %274 = vector.broadcast %273 : f32 to vector<16x128xf32>
    %275 = arith.mulf %274, %6 : vector<16x128xf32>
    %c22_72 = arith.constant 22 : index
    %276 = memref.load %arg5[%c22_72] : memref<32xf32, #tpu.memory_space<smem>>
    %277 = vector.broadcast %276 : f32 to vector<16x128xf32>
    %278 = arith.addf %275, %277 : vector<16x128xf32>
    %cst_73 = arith.constant 0.000000e+00 : f32
    %279 = vector.broadcast %cst_73 : f32 to vector<16x128xf32>
    %280 = arith.maximumf %278, %279 : vector<16x128xf32>
    %281 = vector.broadcast %272 : f32 to vector<16x128xf32>
    %282 = arith.mulf %281, %280 : vector<16x128xf32>
    %283 = arith.addf %271, %282 : vector<16x128xf32>
    %c23 = arith.constant 23 : index
    %284 = memref.load %arg6[%c23] : memref<32xf32, #tpu.memory_space<smem>>
    %c23_74 = arith.constant 23 : index
    %285 = memref.load %arg4[%c23_74] : memref<32xf32, #tpu.memory_space<smem>>
    %286 = vector.broadcast %285 : f32 to vector<16x128xf32>
    %287 = arith.mulf %286, %6 : vector<16x128xf32>
    %c23_75 = arith.constant 23 : index
    %288 = memref.load %arg5[%c23_75] : memref<32xf32, #tpu.memory_space<smem>>
    %289 = vector.broadcast %288 : f32 to vector<16x128xf32>
    %290 = arith.addf %287, %289 : vector<16x128xf32>
    %cst_76 = arith.constant 0.000000e+00 : f32
    %291 = vector.broadcast %cst_76 : f32 to vector<16x128xf32>
    %292 = arith.maximumf %290, %291 : vector<16x128xf32>
    %293 = vector.broadcast %284 : f32 to vector<16x128xf32>
    %294 = arith.mulf %293, %292 : vector<16x128xf32>
    %295 = arith.addf %283, %294 : vector<16x128xf32>
    %c24 = arith.constant 24 : index
    %296 = memref.load %arg6[%c24] : memref<32xf32, #tpu.memory_space<smem>>
    %c24_77 = arith.constant 24 : index
    %297 = memref.load %arg4[%c24_77] : memref<32xf32, #tpu.memory_space<smem>>
    %298 = vector.broadcast %297 : f32 to vector<16x128xf32>
    %299 = arith.mulf %298, %6 : vector<16x128xf32>
    %c24_78 = arith.constant 24 : index
    %300 = memref.load %arg5[%c24_78] : memref<32xf32, #tpu.memory_space<smem>>
    %301 = vector.broadcast %300 : f32 to vector<16x128xf32>
    %302 = arith.addf %299, %301 : vector<16x128xf32>
    %cst_79 = arith.constant 0.000000e+00 : f32
    %303 = vector.broadcast %cst_79 : f32 to vector<16x128xf32>
    %304 = arith.maximumf %302, %303 : vector<16x128xf32>
    %305 = vector.broadcast %296 : f32 to vector<16x128xf32>
    %306 = arith.mulf %305, %304 : vector<16x128xf32>
    %307 = arith.addf %295, %306 : vector<16x128xf32>
    %c25 = arith.constant 25 : index
    %308 = memref.load %arg6[%c25] : memref<32xf32, #tpu.memory_space<smem>>
    %c25_80 = arith.constant 25 : index
    %309 = memref.load %arg4[%c25_80] : memref<32xf32, #tpu.memory_space<smem>>
    %310 = vector.broadcast %309 : f32 to vector<16x128xf32>
    %311 = arith.mulf %310, %6 : vector<16x128xf32>
    %c25_81 = arith.constant 25 : index
    %312 = memref.load %arg5[%c25_81] : memref<32xf32, #tpu.memory_space<smem>>
    %313 = vector.broadcast %312 : f32 to vector<16x128xf32>
    %314 = arith.addf %311, %313 : vector<16x128xf32>
    %cst_82 = arith.constant 0.000000e+00 : f32
    %315 = vector.broadcast %cst_82 : f32 to vector<16x128xf32>
    %316 = arith.maximumf %314, %315 : vector<16x128xf32>
    %317 = vector.broadcast %308 : f32 to vector<16x128xf32>
    %318 = arith.mulf %317, %316 : vector<16x128xf32>
    %319 = arith.addf %307, %318 : vector<16x128xf32>
    %c26 = arith.constant 26 : index
    %320 = memref.load %arg6[%c26] : memref<32xf32, #tpu.memory_space<smem>>
    %c26_83 = arith.constant 26 : index
    %321 = memref.load %arg4[%c26_83] : memref<32xf32, #tpu.memory_space<smem>>
    %322 = vector.broadcast %321 : f32 to vector<16x128xf32>
    %323 = arith.mulf %322, %6 : vector<16x128xf32>
    %c26_84 = arith.constant 26 : index
    %324 = memref.load %arg5[%c26_84] : memref<32xf32, #tpu.memory_space<smem>>
    %325 = vector.broadcast %324 : f32 to vector<16x128xf32>
    %326 = arith.addf %323, %325 : vector<16x128xf32>
    %cst_85 = arith.constant 0.000000e+00 : f32
    %327 = vector.broadcast %cst_85 : f32 to vector<16x128xf32>
    %328 = arith.maximumf %326, %327 : vector<16x128xf32>
    %329 = vector.broadcast %320 : f32 to vector<16x128xf32>
    %330 = arith.mulf %329, %328 : vector<16x128xf32>
    %331 = arith.addf %319, %330 : vector<16x128xf32>
    %c27 = arith.constant 27 : index
    %332 = memref.load %arg6[%c27] : memref<32xf32, #tpu.memory_space<smem>>
    %c27_86 = arith.constant 27 : index
    %333 = memref.load %arg4[%c27_86] : memref<32xf32, #tpu.memory_space<smem>>
    %334 = vector.broadcast %333 : f32 to vector<16x128xf32>
    %335 = arith.mulf %334, %6 : vector<16x128xf32>
    %c27_87 = arith.constant 27 : index
    %336 = memref.load %arg5[%c27_87] : memref<32xf32, #tpu.memory_space<smem>>
    %337 = vector.broadcast %336 : f32 to vector<16x128xf32>
    %338 = arith.addf %335, %337 : vector<16x128xf32>
    %cst_88 = arith.constant 0.000000e+00 : f32
    %339 = vector.broadcast %cst_88 : f32 to vector<16x128xf32>
    %340 = arith.maximumf %338, %339 : vector<16x128xf32>
    %341 = vector.broadcast %332 : f32 to vector<16x128xf32>
    %342 = arith.mulf %341, %340 : vector<16x128xf32>
    %343 = arith.addf %331, %342 : vector<16x128xf32>
    %c28 = arith.constant 28 : index
    %344 = memref.load %arg6[%c28] : memref<32xf32, #tpu.memory_space<smem>>
    %c28_89 = arith.constant 28 : index
    %345 = memref.load %arg4[%c28_89] : memref<32xf32, #tpu.memory_space<smem>>
    %346 = vector.broadcast %345 : f32 to vector<16x128xf32>
    %347 = arith.mulf %346, %6 : vector<16x128xf32>
    %c28_90 = arith.constant 28 : index
    %348 = memref.load %arg5[%c28_90] : memref<32xf32, #tpu.memory_space<smem>>
    %349 = vector.broadcast %348 : f32 to vector<16x128xf32>
    %350 = arith.addf %347, %349 : vector<16x128xf32>
    %cst_91 = arith.constant 0.000000e+00 : f32
    %351 = vector.broadcast %cst_91 : f32 to vector<16x128xf32>
    %352 = arith.maximumf %350, %351 : vector<16x128xf32>
    %353 = vector.broadcast %344 : f32 to vector<16x128xf32>
    %354 = arith.mulf %353, %352 : vector<16x128xf32>
    %355 = arith.addf %343, %354 : vector<16x128xf32>
    %c29 = arith.constant 29 : index
    %356 = memref.load %arg6[%c29] : memref<32xf32, #tpu.memory_space<smem>>
    %c29_92 = arith.constant 29 : index
    %357 = memref.load %arg4[%c29_92] : memref<32xf32, #tpu.memory_space<smem>>
    %358 = vector.broadcast %357 : f32 to vector<16x128xf32>
    %359 = arith.mulf %358, %6 : vector<16x128xf32>
    %c29_93 = arith.constant 29 : index
    %360 = memref.load %arg5[%c29_93] : memref<32xf32, #tpu.memory_space<smem>>
    %361 = vector.broadcast %360 : f32 to vector<16x128xf32>
    %362 = arith.addf %359, %361 : vector<16x128xf32>
    %cst_94 = arith.constant 0.000000e+00 : f32
    %363 = vector.broadcast %cst_94 : f32 to vector<16x128xf32>
    %364 = arith.maximumf %362, %363 : vector<16x128xf32>
    %365 = vector.broadcast %356 : f32 to vector<16x128xf32>
    %366 = arith.mulf %365, %364 : vector<16x128xf32>
    %367 = arith.addf %355, %366 : vector<16x128xf32>
    %c30 = arith.constant 30 : index
    %368 = memref.load %arg6[%c30] : memref<32xf32, #tpu.memory_space<smem>>
    %c30_95 = arith.constant 30 : index
    %369 = memref.load %arg4[%c30_95] : memref<32xf32, #tpu.memory_space<smem>>
    %370 = vector.broadcast %369 : f32 to vector<16x128xf32>
    %371 = arith.mulf %370, %6 : vector<16x128xf32>
    %c30_96 = arith.constant 30 : index
    %372 = memref.load %arg5[%c30_96] : memref<32xf32, #tpu.memory_space<smem>>
    %373 = vector.broadcast %372 : f32 to vector<16x128xf32>
    %374 = arith.addf %371, %373 : vector<16x128xf32>
    %cst_97 = arith.constant 0.000000e+00 : f32
    %375 = vector.broadcast %cst_97 : f32 to vector<16x128xf32>
    %376 = arith.maximumf %374, %375 : vector<16x128xf32>
    %377 = vector.broadcast %368 : f32 to vector<16x128xf32>
    %378 = arith.mulf %377, %376 : vector<16x128xf32>
    %379 = arith.addf %367, %378 : vector<16x128xf32>
    %c31 = arith.constant 31 : index
    %380 = memref.load %arg6[%c31] : memref<32xf32, #tpu.memory_space<smem>>
    %c31_98 = arith.constant 31 : index
    %381 = memref.load %arg4[%c31_98] : memref<32xf32, #tpu.memory_space<smem>>
    %382 = vector.broadcast %381 : f32 to vector<16x128xf32>
    %383 = arith.mulf %382, %6 : vector<16x128xf32>
    %c31_99 = arith.constant 31 : index
    %384 = memref.load %arg5[%c31_99] : memref<32xf32, #tpu.memory_space<smem>>
    %385 = vector.broadcast %384 : f32 to vector<16x128xf32>
    %386 = arith.addf %383, %385 : vector<16x128xf32>
    %cst_100 = arith.constant 0.000000e+00 : f32
    %387 = vector.broadcast %cst_100 : f32 to vector<16x128xf32>
    %388 = arith.maximumf %386, %387 : vector<16x128xf32>
    %389 = vector.broadcast %380 : f32 to vector<16x128xf32>
    %390 = arith.mulf %389, %388 : vector<16x128xf32>
    %391 = arith.addf %379, %390 : vector<16x128xf32>
    %c0_101 = arith.constant 0 : index
    %392 = memref.load %arg7[%c0_101] : memref<1xf32, #tpu.memory_space<smem>>
    %393 = vector.broadcast %392 : f32 to vector<16x128xf32>
    %394 = arith.addf %391, %393 : vector<16x128xf32>
    %c0_102 = arith.constant 0 : index
    %c0_103 = arith.constant 0 : index
    %c0_104 = arith.constant 0 : index
    %395 = vector.load %arg8[%c0_102, %c0_103, %c0_104] : memref<1x16x128xf32, #tpu.memory_space<vmem>>, vector<1x16x128xf32>
    %396 = vector.shape_cast %395 : vector<1x16x128xf32> to vector<16x128xf32>
    %397 = vector.shape_cast %394 : vector<16x128xf32> to vector<1x16x128xf32>
    tpu.vector_store %arg8[%c0_102, %c0_103, %c0_104], %397 {strides = array<i32>} : memref<1x16x128xf32, #tpu.memory_space<vmem>>, vector<1x16x128xf32>,
    return
  }
  func.func @transform_0(%arg0: i32, %arg1: i32) -> (i32, i32, i32) {
    %c0_i32 = arith.constant 0 : i32
    %c0_i32_0 = arith.constant 0 : i32
    return %arg0, %arg1, %c0_i32 : i32, i32, i32
  }
  func.func @transform_1(%arg0: i32, %arg1: i32) -> i32 {
    %c0_i32 = arith.constant 0 : i32
    %c0_i32_0 = arith.constant 0 : i32
    return %c0_i32 : i32
  }
  func.func @transform_2(%arg0: i32, %arg1: i32) -> i32 {
    %c0_i32 = arith.constant 0 : i32
    %c0_i32_0 = arith.constant 0 : i32
    return %c0_i32 : i32
  }
  func.func @transform_3(%arg0: i32, %arg1: i32) -> i32 {
    %c0_i32 = arith.constant 0 : i32
    %c0_i32_0 = arith.constant 0 : i32
    return %c0_i32 : i32
  }
  func.func @transform_4(%arg0: i32, %arg1: i32) -> i32 {
    %c0_i32 = arith.constant 0 : i32
    %c0_i32_0 = arith.constant 0 : i32
    return %c0_i32 : i32
  }
  func.func @transform_5(%arg0: i32, %arg1: i32) -> i32 {
    %c0_i32 = arith.constant 0 : i32
    %c0_i32_0 = arith.constant 0 : i32
    return %c0_i32 : i32
  }
  func.func @transform_6(%arg0: i32, %arg1: i32) -> (i32, i32, i32) {
    %c0_i32 = arith.constant 0 : i32
    %c0_i32_0 = arith.constant 0 : i32
    return %arg0, %arg1, %c0_i32 : i32, i32, i32
  }
}

</mosaic_0001>

<llo_original>
// kernel: custom-call
$region0: #{custom-call}
  %s0 = inlined_call_operand.hbm [shape: c64[8,16,16], index: 0, kind: input, shape index: {}]
  %s1 = inlined_call_operand.vmem [shape: f32[8,16,16], index: 1, kind: output, shape index: {}]
  $region1: #{custom-call} parent=0
    #allocation0 [shape = 's32[1]{0}', space=sflag, size = 0x4, scoped, tag = 'scoped memory for custom-call']
    %2 = vsyncpa [#allocation0], 0
    %s4 = sshll.u32 %s0, 4
    %s5 = int_to_ptr.hbm [resolvable:$true] %s4
    %s6 = sshll.u32 %s1, 4
    %s7 = int_to_ptr.vmem [resolvable:$true] %s6
    %9 = dma.hbm_to_vmem [thread:$0]  %s5, 2048, %s7, [#allocation0]
    %11 = dma.done [#allocation0], 2048
    %12 = vsyncpa [#allocation0], 1

// kernel: custom-call.1
$region0: #{custom-call.1}
  %s0 = inlined_call_operand.hbm [shape: c64[8,16,16], index: 0, kind: input, shape index: {}]
  %s1 = inlined_call_operand.vmem [shape: f32[8,16,16], index: 1, kind: output, shape index: {}]
  %s2 = scalar_lea.hbm %s0, 128
  $region1: #{custom-call.1} parent=0
    #allocation0 [shape = 's32[1]{0}', space=sflag, size = 0x4, scoped, tag = 'scoped memory for custom-call.1']
    %3 = vsyncpa [#allocation0], 0
    %s5 = sshll.u32 %s2, 4
    %s6 = int_to_ptr.hbm [resolvable:$true] %s5
    %s7 = sshll.u32 %s1, 4
    %s8 = int_to_ptr.vmem [resolvable:$true] %s7
    %10 = dma.hbm_to_vmem [thread:$0]  %s6, 2048, %s8, [#allocation0]
    %12 = dma.done [#allocation0], 2048
    %13 = vsyncpa [#allocation0], 1

// kernel: vsmodel_forward.2
$region0: #{vsmodel_forward.2}
  #allocation0 [shape = 'u32[]', space=smem, size = 0x4, offset = 0x4, fixed_abs, tag = 'smem constant byte address 0x4 - core index']
  #allocation1 [shape = 'u32[72,128]{1,0:T(1,128)}', space=vmem, size = 0x9000, scoped, tag = 'internal scratch']
  %s0 = inlined_call_operand.vmem [shape: f32[2,2,8,256], index: 0, kind: input, shape index: {}]
  %s1 = inlined_call_operand.vmem [shape: f32[1,2,8,256], index: 1, kind: input, shape index: {}]
  %s2 = inlined_call_operand.vmem [shape: f32[2,2,8,256], index: 2, kind: output, shape index: {}]
  %s3 = sld [smem:[#allocation0]]
  $region41: #{vsmodel_forward.2} parent=0
    _
  %s5 = ssub.s32 1, %s3
  %s6 = scalar_select 0, %s5, %s3
  loop: start=0, step=1, limit=4
  $region2: #{vsmodel_forward.2} parent=0 // loop_pre_header
    _
  $region3: #{vsmodel_forward.2} parent=0 // loop_header
    %s8 = sphi 0, %s12
    %p9 = scmp.ge.s32.totalorder %s8, 4
    %s15 = sphi 0, %s34
    %s16 = sphi 0, %s30
    %s17 = sphi 0, %s26
    %s18 = sphi 0, %s15
    %s19 = sphi 0, %s16
    %s20 = sphi 0, %s17
    %s21 = sphi 0, %s18
    %s22 = sphi 0, %s19
    %s23 = sphi 0, %s20
    %s41 = sphi 0, %s43
    %s44 = sphi 0, %s41
    %s45 = sphi 0, %s44
    %s61 = sphi 0, %s45
    %s69 = sphi 0, %s71
    %s72 = sphi 0, %s69
    %s73 = sphi 0, %s72
    %s89 = sphi 0, %s73
    %s99 = sphi 0, %s101
    %s102 = sphi 0, %s99
    %s103 = sphi 0, %s102
    %s119 = sphi 0, %s103
  $region4: #{vsmodel_forward.2} parent=0 // loop_header_branch
    %11 = sbr.rel (%p9) target = $region8
  $region5: #{vsmodel_forward.2} parent=0 // loop_body
    %s13 = ssub.s32 %s8, 1
    %s14 = ssub.s32 %s8, 2
    %s24 = sadd.s32 1, %s17
    %p25 = scmp.ge.s32.totalorder %s24, 2
    %s26 = scalar_select %p25, 0, %s24
    %s27 = sadd.s32 1, %s16
    %s28 = scalar_select %p25, %s27, %s16
    %p29 = scmp.ge.s32.totalorder %s28, 1
    %s30 = scalar_select %p29, 0, %s28
    %s31 = sadd.s32 1, %s15
    %s32 = scalar_select %p29, %s31, %s15
    %p33 = scmp.ge.s32.totalorder %s32, 1
    %s34 = scalar_select %p33, 0, %s32
    %s35 = ssub.s32 %s17, %s26
    %s36 = ssub.s32 %s15, %s34
    %s37 = sor.u32 %s35, %s36
    %s38 = ssub.s32 %s16, %s30
    %s39 = sor.u32 %s37, %s38
    %p40 = scmp.eq.s32.totalorder %s39, 0
    %s42 = sadd.s32 %s41, 1
    %s43 = scalar_select %p40, %s41, %s42
    %p46 = pneg %p40
    %p47 = scmp.eq.s32.totalorder %s8, 1
    %p48 = por %p46, %p47
    %p49 = scmp.ne.s32.totalorder %s41, %s44
    %p50 = scmp.eq.s32.totalorder %s8, 0
    %p51 = por %p49, %p50
    %p52 = scmp.ne.s32.totalorder %s41, %s44
    %p53 = scmp.eq.s32.totalorder %s13, 1
    %p54 = por %p52, %p53
    %p55 = scmp.ne.s32.totalorder %s44, %s45
    %p56 = scmp.eq.s32.totalorder %s13, 0
    %p57 = por %p55, %p56
    %p58 = scmp.ne.s32.totalorder %s44, %s45
    %p59 = scmp.eq.s32.totalorder %s14, 1
    %p60 = por %p58, %p59
    %p62 = scmp.ne.s32.totalorder %s45, %s61
    %p63 = scmp.eq.s32.totalorder %s14, 0
    %p64 = por %p62, %p63
    %s65 = ssub.s32 %s15, %s34
    %s66 = ssub.s32 %s16, %s30
    %s67 = sor.u32 %s65, %s66
    %p68 = scmp.eq.s32.totalorder %s67, 0
    %s70 = sadd.s32 %s69, 1
    %s71 = scalar_select %p68, %s69, %s70
    %p74 = pneg %p68
    %p75 = scmp.eq.s32.totalorder %s8, 1
    %p76 = por %p74, %p75
    %p77 = scmp.ne.s32.totalorder %s69, %s72
    %p78 = scmp.eq.s32.totalorder %s8, 0
    %p79 = por %p77, %p78
    %p80 = scmp.ne.s32.totalorder %s69, %s72
    %p81 = scmp.eq.s32.totalorder %s13, 1
    %p82 = por %p80, %p81
    %p83 = scmp.ne.s32.totalorder %s72, %s73
    %p84 = scmp.eq.s32.totalorder %s13, 0
    %p85 = por %p83, %p84
    %p86 = scmp.ne.s32.totalorder %s72, %s73
    %p87 = scmp.eq.s32.totalorder %s14, 1
    %p88 = por %p86, %p87
    %p90 = scmp.ne.s32.totalorder %s73, %s89
    %p91 = scmp.eq.s32.totalorder %s14, 0
    %p92 = por %p90, %p91
    %s93 = ssub.s32 %s17, %s26
    %s94 = ssub.s32 %s15, %s34
    %s95 = sor.u32 %s93, %s94
    %s96 = ssub.s32 %s16, %s30
    %s97 = sor.u32 %s95, %s96
    %p98 = scmp.eq.s32.totalorder %s97, 0
    %s100 = sadd.s32 %s99, 1
    %s101 = scalar_select %p98, %s99, %s100
    %p104 = pneg %p98
    %p105 = scmp.eq.s32.totalorder %s8, 1
    %p106 = por %p104, %p105
    %p107 = scmp.ne.s32.totalorder %s99, %s102
    %p108 = scmp.eq.s32.totalorder %s8, 0
    %p109 = por %p107, %p108
    %p110 = scmp.ne.s32.totalorder %s99, %s102
    %p111 = scmp.eq.s32.totalorder %s13, 1
    %p112 = por %p110, %p111
    %p113 = scmp.ne.s32.totalorder %s102, %s103
    %p114 = scmp.eq.s32.totalorder %s13, 0
    %p115 = por %p113, %p114
    %p116 = scmp.ne.s32.totalorder %s102, %s103
    %p117 = scmp.eq.s32.totalorder %s14, 1
    %p118 = por %p116, %p117
    %p120 = scmp.ne.s32.totalorder %s103, %s119
    %p121 = scmp.eq.s32.totalorder %s14, 0
    %p122 = por %p120, %p121
    %p123 = scmp.le.s32.totalorder 1, %s8
    %p124 = scmp.lt.s32.totalorder %s8, 3
    %p125 = pnand %p123, %p124
    %p126 = pneg %p125
    // Predicated region
    $region9: #{vsmodel_forward.2} parent=5 // pred_check
      _
    $region10: #{vsmodel_forward.2} parent=5 // pred_check_branch
      %128 = sbr.rel (%p125) target = $region12
    $region11: #{vsmodel_forward.2} parent=5 // pred_region
      %s129 = ssub.s32 %s8, 1
      // Predicated region
      $region13: #{vsmodel_forward.2} parent=11 // pred_check
        %p130 = pneg %p85
      $region14: #{vsmodel_forward.2} parent=11 // pred_check_branch
        %132 = sbr.rel (%p130) target = $region16
      $region15: #{vsmodel_forward.2} parent=11 // pred_region
        %s133 = smul.u32 2, %s19
        %p134 = scmp.lt.s32.totalorder %s18, 0
        %s135 = scalar_select %p134, %s18, 0
        %p136 = scmp.lt.s32.totalorder %s133, 1
        %s137 = scalar_select %p136, %s133, 1
        %s138 = smul.addr %s135, 2
        %s139 = sadd.s32 %s137, %s138
        %s140 = smul.addr %s139, 8
        %s141 = scalar_lea.vmem %s1, %s140
        %s142 = smul.u32 2, %s19
      $region16: #{vsmodel_forward.2} parent=11 // pred_fallthru
        _
    $region12: #{vsmodel_forward.2} parent=5 // pred_fallthru
      _
    %p143 = scmp.lt.s32.totalorder %s8, 2
    // Predicated region
    $region17: #{vsmodel_forward.2} parent=5 // pred_check
      %p144 = pneg %p143
    $region18: #{vsmodel_forward.2} parent=5 // pred_check_branch
      %146 = sbr.rel (%p144) target = $region20
    $region19: #{vsmodel_forward.2} parent=5 // pred_region
      // Predicated region
      $region21: #{vsmodel_forward.2} parent=19 // pred_check
        %p147 = pneg %p51
      $region22: #{vsmodel_forward.2} parent=19 // pred_check_branch
        %149 = sbr.rel (%p147) target = $region24
      $region23: #{vsmodel_forward.2} parent=19 // pred_region
        %s150 = smul.u32 2, %s16
        %p151 = scmp.lt.s32.totalorder %s17, 1
        %s152 = scalar_select %p151, %s17, 1
        %p153 = scmp.lt.s32.totalorder %s15, 0
        %s154 = scalar_select %p153, %s15, 0
        %p155 = scmp.lt.s32.totalorder %s150, 1
        %s156 = scalar_select %p155, %s150, 1
        %s157 = smul.addr %s154, 2
        %s158 = sadd.s32 %s156, %s157
        %s159 = smul.addr %s152, 4
        %s160 = sadd.s32 %s158, %s159
        %s161 = smul.addr %s160, 8
        %s162 = scalar_lea.vmem %s0, %s161
        %s163 = smul.u32 2, %s16
      $region24: #{vsmodel_forward.2} parent=19 // pred_fallthru
        _
    $region20: #{vsmodel_forward.2} parent=5 // pred_fallthru
      _
    %p164 = scmp.le.s32.totalorder 1, %s8
    %p165 = scmp.lt.s32.totalorder %s8, 3
    %p166 = pnand %p164, %p165
    %p167 = pneg %p166
    // Predicated region
    $region25: #{vsmodel_forward.2} parent=5 // pred_check
      _
    $region26: #{vsmodel_forward.2} parent=5 // pred_check_branch
      %169 = sbr.rel (%p166) target = $region28
    $region27: #{vsmodel_forward.2} parent=5 // pred_region
      %s170 = ssub.s32 %s8, 1
      %s171 = smul.u32 2, %s19
      %p172 = scmp.lt.s32.totalorder %s20, 1
      %s173 = scalar_select %p172, %s20, 1
      %p174 = scmp.lt.s32.totalorder %s18, 0
      %s175 = scalar_select %p174, %s18, 0
      %p176 = scmp.lt.s32.totalorder %s171, 1
      %s177 = scalar_select %p176, %s171, 1
      %s178 = smul.addr %s175, 2
      %s179 = sadd.s32 %s177, %s178
      %s180 = smul.addr %s173, 4
      %s181 = sadd.s32 %s179, %s180
      %s182 = smul.addr %s181, 8
      %s183 = scalar_lea.vmem %s0, %s182
      %p184 = pneg %p57
      %p185 = pneg %p54
      %s186 = smul.u32 2, %s19
      %p187 = scmp.lt.s32.totalorder %s18, 0
      %s188 = scalar_select %p187, %s18, 0
      %p189 = scmp.lt.s32.totalorder %s186, 1
      %s190 = scalar_select %p189, %s186, 1
      %s191 = smul.addr %s188, 2
      %s192 = sadd.s32 %s190, %s191
      %s193 = smul.addr %s192, 8
      %s194 = scalar_lea.vmem %s1, %s193
      %p195 = pneg %p85
      %p196 = pneg %p82
      %p197 = pneg %p115
      %p198 = pneg %p112
      %s199 = smul.u32 2, %s19
      %p200 = scmp.lt.s32.totalorder %s20, 1
      %s201 = scalar_select %p200, %s20, 1
      %p202 = scmp.lt.s32.totalorder %s18, 0
      %s203 = scalar_select %p202, %s18, 0
      %p204 = scmp.lt.s32.totalorder %s199, 1
      %s205 = scalar_select %p204, %s199, 1
      %s206 = smul.addr %s203, 2
      %s207 = sadd.s32 %s205, %s206
      %s208 = smul.addr %s201, 4
      %s209 = sadd.s32 %s207, %s208
      %s210 = smul.addr %s209, 8
      %s211 = scalar_lea.vmem %s2, %s210
      %s212 = smul.u32 2, %s19
      %p213 = scmp.lt.s32.totalorder %s20, 1
      %s214 = scalar_select %p213, %s20, 1
      %p215 = scmp.lt.s32.totalorder %s18, 0
      %s216 = scalar_select %p215, %s18, 0
      %p217 = scmp.lt.s32.totalorder %s212, 1
      %s218 = scalar_select %p217, %s212, 1
      %s219 = smul.addr %s216, 2
      %s220 = sadd.s32 %s218, %s219
      %s221 = smul.addr %s214, 4
      %s222 = sadd.s32 %s220, %s221
      %s223 = smul.addr %s222, 8
      %s224 = scalar_lea.vmem %s0, %s223
      %s225 = smul.u32 2, %s19
      %s226 = smul.u32 2, %s19
      %p227 = scmp.lt.s32.totalorder %s18, 0
      %s228 = scalar_select %p227, %s18, 0
      %p229 = scmp.lt.s32.totalorder %s226, 1
      %s230 = scalar_select %p229, %s226, 1
      %s231 = smul.addr %s228, 2
      %s232 = sadd.s32 %s230, %s231
      %s233 = smul.addr %s232, 8
      %s234 = scalar_lea.vmem %s1, %s233
      %s235 = smul.u32 2, %s19
      %s236 = smul.u32 2, %s19
      %p237 = scmp.lt.s32.totalorder %s20, 1
      %s238 = scalar_select %p237, %s20, 1
      %p239 = scmp.lt.s32.totalorder %s18, 0
      %s240 = scalar_select %p239, %s18, 0
      %p241 = scmp.lt.s32.totalorder %s236, 1
      %s242 = scalar_select %p241, %s236, 1
      %s243 = smul.addr %s240, 2
      %s244 = sadd.s32 %s242, %s243
      %s245 = smul.addr %s238, 4
      %s246 = sadd.s32 %s244, %s245
      %s247 = smul.addr %s246, 8
      %s248 = scalar_lea.vmem %s2, %s247
      %s249 = smul.u32 2, %s19
      %v250 = vld [vmem:[%s224] sm:$0xff]
      %v251 = vld [vmem:[%s224 + $0x8] sm:$0xff]
      %s252 = scalar_lea.vmem %s224, 16
      %v253 = vld [vmem:[%s252] sm:$0xff]
      %v254 = vld [vmem:[%s252 + $0x8] sm:$0xff]
      %v255 = vld [vmem:[%s234] sm:$0xff]
      %v256 = vld [vmem:[%s234 + $0x8] sm:$0xff]
      %s257 = scalar_lea.vmem %s234, 16
      %v258 = vld [vmem:[%s257] sm:$0xff]
      %v259 = vld [vmem:[%s257 + $0x8] sm:$0xff]
      %v260 = vmul.f32 %v250, %v255
      %v261 = vmul.f32 %v251, %v256
      %v262 = vmul.f32 %v253, %v258
      %v263 = vmul.f32 %v254, %v259
      %v264 = vsub.f32 %v260, %v262
      %v265 = vsub.f32 %v261, %v263
      %266 = vst [vmem:[%s248] sm:$0xff] %v264
      %267 = vst [vmem:[%s248 + $0x8] sm:$0xff] %v265
      %v268 = vmul.f32 %v250, %v258
      %v269 = vmul.f32 %v251, %v259
      %v270 = vmul.f32 %v253, %v255
      %v271 = vmul.f32 %v254, %v256
      %v272 = vadd.f32 %v268, %v270
      %v273 = vadd.f32 %v269, %v271
      %s274 = scalar_lea.vmem %s248, 16
      %275 = vst [vmem:[%s274] sm:$0xff] %v272
      %276 = vst [vmem:[%s274 + $0x8] sm:$0xff] %v273
      %s277 = smul.u32 2, %s19
      %p278 = scmp.lt.s32.totalorder %s20, 1
      %s279 = scalar_select %p278, %s20, 1
      %p280 = scmp.lt.s32.totalorder %s18, 0
      %s281 = scalar_select %p280, %s18, 0
      %p282 = scmp.lt.s32.totalorder %s277, 1
      %s283 = scalar_select %p282, %s277, 1
      %s284 = smul.addr %s281, 2
      %s285 = sadd.s32 %s283, %s284
      %s286 = smul.addr %s279, 4
      %s287 = sadd.s32 %s285, %s286
      %s288 = smul.addr %s287, 8
      %s289 = scalar_lea.vmem %s2, %s288
      // Predicated region
      $region29: #{vsmodel_forward.2} parent=27 // pred_check
        %p290 = pneg %p112
      $region30: #{vsmodel_forward.2} parent=27 // pred_check_branch
        %292 = sbr.rel (%p290) target = $region32
      $region31: #{vsmodel_forward.2} parent=27 // pred_region
        %s293 = smul.u32 2, %s19
      $region32: #{vsmodel_forward.2} parent=27 // pred_fallthru
        _
    $region28: #{vsmodel_forward.2} parent=5 // pred_fallthru
      _
    %p294 = scmp.le.s32.totalorder 2, %s8
    // Predicated region
    $region33: #{vsmodel_forward.2} parent=5 // pred_check
      %p295 = pneg %p294
    $region34: #{vsmodel_forward.2} parent=5 // pred_check_branch
      %297 = sbr.rel (%p295) target = $region36
    $region35: #{vsmodel_forward.2} parent=5 // pred_region
      %s298 = ssub.s32 %s8, 2
      // Predicated region
      $region37: #{vsmodel_forward.2} parent=35 // pred_check
        %p299 = pneg %p118
      $region38: #{vsmodel_forward.2} parent=35 // pred_check_branch
        %301 = sbr.rel (%p299) target = $region40
      $region39: #{vsmodel_forward.2} parent=35 // pred_region
        %s302 = smul.u32 2, %s22
        %p303 = scmp.lt.s32.totalorder %s23, 1
        %s304 = scalar_select %p303, %s23, 1
        %p305 = scmp.lt.s32.totalorder %s21, 0
        %s306 = scalar_select %p305, %s21, 0
        %p307 = scmp.lt.s32.totalorder %s302, 1
        %s308 = scalar_select %p307, %s302, 1
        %s309 = smul.addr %s306, 2
        %s310 = sadd.s32 %s308, %s309
        %s311 = smul.addr %s304, 4
        %s312 = sadd.s32 %s310, %s311
        %s313 = smul.addr %s312, 8
        %s314 = scalar_lea.vmem %s2, %s313
      $region40: #{vsmodel_forward.2} parent=35 // pred_fallthru
        _
    $region36: #{vsmodel_forward.2} parent=5 // pred_fallthru
      _
  $region6: #{vsmodel_forward.2} parent=0 // loop_footer
    %s12 = sadd.s32 1, %s8
  $region7: #{vsmodel_forward.2} parent=0 // loop_footer_branch
    %7 = sbr.rel target = $region3
  $region8: #{vsmodel_forward.2} parent=0 // loop_exit
    _

// kernel: reverse.0
$region0: #{reverse.0}
  %s0 = inlined_call_operand.vmem [shape: f32[2,1,8,16,7], index: 0, kind: input, shape index: {}]
  %s1 = inlined_call_operand.vmem [shape: f32[2,1,8,16,7], index: 1, kind: output, shape index: {}]
  $region1: #{reverse.0} parent=0
    #allocation0 [shape = 'u8[131072]{0}', space=vmem, size = 0x20000, scoped, tag = 'operand span for operand 0']
    #allocation1 [shape = 'u8[65536]{0}', space=vmem, size = 0x10000, scoped, tag = 'operand span for operand 1']
    %s2 = scalar_lea.vmem [#allocation0], 8
    // Predicated region
    $region2: #{reverse.0} parent=1 // pred_check
      _
    $region3: #{reverse.0} parent=1 // pred_check_branch
      %4 = sbr.rel (0) target = $region5
    $region4: #{reverse.0} parent=1 // pred_region
      // Predicated region
      $region6: #{reverse.0} parent=4 // pred_check
        _
      $region7: #{reverse.0} parent=4 // pred_check_branch
        %6 = sbr.rel (0) target = $region9
      $region8: #{reverse.0} parent=4 // pred_region
        // Predicated region
        $region21: #{reverse.0} parent=8 // pred_check
          _
        $region22: #{reverse.0} parent=8 // pred_check_branch
          %52 = sbr.rel (0) target = $region24
        $region23: #{reverse.0} parent=8 // pred_region
          loop: start=0, step=1, limit=1
          $region25: #{reverse.0} parent=23 // loop_pre_header
            _
          $region26: #{reverse.0} parent=23 // loop_header
            %s54 = sphi 0, %s58
            %p55 = scmp.ge.s32.totalorder %s54, 1
            %s59 = sphi %s0, %s0
            %s60 = sphi %s2, %s2
          $region27: #{reverse.0} parent=23 // loop_header_branch
            %57 = sbr.rel (%p55) target = $region31
          $region28: #{reverse.0} parent=23 // loop_body
            %v61 = vld [vmem:[%s59] sm:$0xff]
            %62 = vst [vmem:[%s60] sm:$0xff] %v61
            %v63 = vld [vmem:[%s59 + $0x8] sm:$0xff]
            %64 = vst [vmem:[%s60 + $0x10] sm:$0xff] %v63
            %v65 = vld [vmem:[%s59 + $0x10] sm:$0xff]
            %66 = vst [vmem:[%s60 + $0x20] sm:$0xff] %v65
            %v67 = vld [vmem:[%s59 + $0x18] sm:$0xff]
            %68 = vst [vmem:[%s60 + $0x30] sm:$0xff] %v67
            %v69 = vld [vmem:[%s59 + $0x20] sm:$0xff]
            %70 = vst [vmem:[%s60 + $0x40] sm:$0xff] %v69
            %v71 = vld [vmem:[%s59 + $0x28] sm:$0xff]
            %72 = vst [vmem:[%s60 + $0x50] sm:$0xff] %v71
            %v73 = vld [vmem:[%s59 + $0x30] sm:$0xff]
            %74 = vst [vmem:[%s60 + $0x60] sm:$0xff] %v73
            %v75 = vld [vmem:[%s59 + $0x38] sm:$0xff]
            %76 = vst [vmem:[%s60 + $0x70] sm:$0xff] %v75
            %v77 = vld [vmem:[%s59 + $0x40] sm:$0xff]
            %78 = vst [vmem:[%s60 + $0x80] sm:$0xff] %v77
            %v79 = vld [vmem:[%s59 + $0x48] sm:$0xff]
            %80 = vst [vmem:[%s60 + $0x90] sm:$0xff] %v79
            %v81 = vld [vmem:[%s59 + $0x50] sm:$0xff]
            %82 = vst [vmem:[%s60 + $0xa0] sm:$0xff] %v81
            %v83 = vld [vmem:[%s59 + $0x58] sm:$0xff]
            %84 = vst [vmem:[%s60 + $0xb0] sm:$0xff] %v83
            %v85 = vld [vmem:[%s59 + $0x60] sm:$0xff]
            %86 = vst [vmem:[%s60 + $0xc0] sm:$0xff] %v85
            %v87 = vld [vmem:[%s59 + $0x68] sm:$0xff]
            %88 = vst [vmem:[%s60 + $0xd0] sm:$0xff] %v87
            %v89 = vld [vmem:[%s59 + $0x70] sm:$0xff]
            %90 = vst [vmem:[%s60 + $0xe0] sm:$0xff] %v89
            %v91 = vld [vmem:[%s59 + $0x78] sm:$0xff]
            %92 = vst [vmem:[%s60 + $0xf0] sm:$0xff] %v91
          $region29: #{reverse.0} parent=23 // loop_footer
            %s58 = sadd.s32 1, %s54
          $region30: #{reverse.0} parent=23 // loop_footer_branch
            %53 = sbr.rel target = $region26
          $region31: #{reverse.0} parent=23 // loop_exit
            _
        $region24: #{reverse.0} parent=8 // pred_fallthru
          _
        // Predicated region
        $region32: #{reverse.0} parent=8 // pred_check
          _
        $region33: #{reverse.0} parent=8 // pred_check_branch
          %94 = sbr.rel target = $region35
        $region34: #{reverse.0} parent=8 // pred_region
          _
        $region35: #{reverse.0} parent=8 // pred_fallthru
          _
      $region9: #{reverse.0} parent=4 // pred_fallthru
        _
      // Predicated region
      $region10: #{reverse.0} parent=4 // pred_check
        _
      $region11: #{reverse.0} parent=4 // pred_check_branch
        %8 = sbr.rel target = $region13
      $region12: #{reverse.0} parent=4 // pred_region
        %s10 = ssub.s32 256, 1
        loop: start=0, step=1, limit=1
        $region14: #{reverse.0} parent=12 // loop_pre_header
          _
        $region15: #{reverse.0} parent=12 // loop_header
          %s12 = sphi 0, %s16
          %p13 = scmp.ge.s32.totalorder %s12, 1
          %s17 = sphi %s0, %s0
          %s18 = sphi %s2, %s2
        $region16: #{reverse.0} parent=12 // loop_header_branch
          %15 = sbr.rel (%p13) target = $region20
        $region17: #{reverse.0} parent=12 // loop_body
          %v19 = vld [vmem:[%s17] sm:%s10]
          %20 = vst [vmem:[%s18] sm:%s10] %v19
          %v21 = vld [vmem:[%s17 + $0x8] sm:%s10]
          %22 = vst [vmem:[%s18 + $0x10] sm:%s10] %v21
          %v23 = vld [vmem:[%s17 + $0x10] sm:%s10]
          %24 = vst [vmem:[%s18 + $0x20] sm:%s10] %v23
          %v25 = vld [vmem:[%s17 + $0x18] sm:%s10]
          %26 = vst [vmem:[%s18 + $0x30] sm:%s10] %v25
          %v27 = vld [vmem:[%s17 + $0x20] sm:%s10]
          %28 = vst [vmem:[%s18 + $0x40] sm:%s10] %v27
          %v29 = vld [vmem:[%s17 + $0x28] sm:%s10]
          %30 = vst [vmem:[%s18 + $0x50] sm:%s10] %v29
          %v31 = vld [vmem:[%s17 + $0x30] sm:%s10]
          %32 = vst [vmem:[%s18 + $0x60] sm:%s10] %v31
          %v33 = vld [vmem:[%s17 + $0x38] sm:%s10]
          %34 = vst [vmem:[%s18 + $0x70] sm:%s10] %v33
          %v35 = vld [vmem:[%s17 + $0x40] sm:%s10]
          %36 = vst [vmem:[%s18 + $0x80] sm:%s10] %v35
          %v37 = vld [vmem:[%s17 + $0x48] sm:%s10]
          %38 = vst [vmem:[%s18 + $0x90] sm:%s10] %v37
          %v39 = vld [vmem:[%s17 + $0x50] sm:%s10]
          %40 = vst [vmem:[%s18 + $0xa0] sm:%s10] %v39
          %v41 = vld [vmem:[%s17 + $0x58] sm:%s10]
          %42 = vst [vmem:[%s18 + $0xb0] sm:%s10] %v41
          %v43 = vld [vmem:[%s17 + $0x60] sm:%s10]
          %44 = vst [vmem:[%s18 + $0xc0] sm:%s10] %v43
          %v45 = vld [vmem:[%s17 + $0x68] sm:%s10]
          %46 = vst [vmem:[%s18 + $0xd0] sm:%s10] %v45
          %v47 = vld [vmem:[%s17 + $0x70] sm:%s10]
          %48 = vst [vmem:[%s18 + $0xe0] sm:%s10] %v47
          %v49 = vld [vmem:[%s17 + $0x78] sm:%s10]
          %50 = vst [vmem:[%s18 + $0xf0] sm:%s10] %v49
        $region18: #{reverse.0} parent=12 // loop_footer
          %s16 = sadd.s32 1, %s12
        $region19: #{reverse.0} parent=12 // loop_footer_branch
          %11 = sbr.rel target = $region15
        $region20: #{reverse.0} parent=12 // loop_exit
          _
      $region13: #{reverse.0} parent=4 // pred_fallthru
        _
    $region5: #{reverse.0} parent=1 // pred_fallthru
      _
    %95 = vnop
    %s96 = scalar_lea.vmem [#allocation0], 7
    %v97 = vld [vmem:[%s96] ss:$-1 sm:$0xff]
    %v98 = vrot.slane %v97, 1
    %99 = vst [vmem:[#allocation1] sm:$0xff] %v98
    %s100 = scalar_lea.vmem [#allocation0], 8
    %s101 = scalar_lea.vmem %s100, 7 [#allocation0]
    %v102 = vld [vmem:[%s101] ss:$-1 sm:$0xff]
    %v103 = vrot.slane %v102, 1
    %v104 = vlaneseq
    %v105 = vshrl.u32 %v104, 7
    %vm106 = vcmp.lt.s32.totalorder %v105, 7
    %107 = vst.msk [vmem:[#allocation1] sm:$0xff] %vm106, %v103
    %s108 = scalar_lea.vmem [#allocation1], 8
    %s109 = scalar_lea.vmem [#allocation0], 16
    %s110 = scalar_lea.vmem %s109, 7 [#allocation0]
    %v111 = vld [vmem:[%s110] ss:$-1 sm:$0xff]
    %v112 = vrot.slane %v111, 1
    %113 = vst [vmem:[%s108] sm:$0xff] %v112
    %s114 = scalar_lea.vmem %s109, 8 [#allocation0]
    %s115 = scalar_lea.vmem %s114, 7 [#allocation0]
    %v116 = vld [vmem:[%s115] ss:$-1 sm:$0xff]
    %v117 = vrot.slane %v116, 1
    %v118 = vlaneseq
    %v119 = vshrl.u32 %v118, 7
    %vm120 = vcmp.lt.s32.totalorder %v119, 7
    %121 = vst.msk [vmem:[%s108] sm:$0xff] %vm120, %v117
    %s122 = scalar_lea.vmem [#allocation1], 16
    %s123 = scalar_lea.vmem [#allocation0], 32
    %s124 = scalar_lea.vmem %s123, 7 [#allocation0]
    %v125 = vld [vmem:[%s124] ss:$-1 sm:$0xff]
    %v126 = vrot.slane %v125, 1
    %127 = vst [vmem:[%s122] sm:$0xff] %v126
    %s128 = scalar_lea.vmem %s123, 8 [#allocation0]
    %s129 = scalar_lea.vmem %s128, 7 [#allocation0]
    %v130 = vld [vmem:[%s129] ss:$-1 sm:$0xff]
    %v131 = vrot.slane %v130, 1
    %v132 = vlaneseq
    %v133 = vshrl.u32 %v132, 7
    %vm134 = vcmp.lt.s32.totalorder %v133, 7
    %135 = vst.msk [vmem:[%s122] sm:$0xff] %vm134, %v131
    %s136 = scalar_lea.vmem [#allocation1], 24
    %s137 = scalar_lea.vmem [#allocation0], 48
    %s138 = scalar_lea.vmem %s137, 7 [#allocation0]
    %v139 = vld [vmem:[%s138] ss:$-1 sm:$0xff]
    %v140 = vrot.slane %v139, 1
    %141 = vst [vmem:[%s136] sm:$0xff] %v140
    %s142 = scalar_lea.vmem %s137, 8 [#allocation0]
    %s143 = scalar_lea.vmem %s142, 7 [#allocation0]
    %v144 = vld [vmem:[%s143] ss:$-1 sm:$0xff]
    %v145 = vrot.slane %v144, 1
    %v146 = vlaneseq
    %v147 = vshrl.u32 %v146, 7
    %vm148 = vcmp.lt.s32.totalorder %v147, 7
    %149 = vst.msk [vmem:[%s136] sm:$0xff] %vm148, %v145
    %s150 = scalar_lea.vmem [#allocation1], 32
    %s151 = scalar_lea.vmem [#allocation0], 64
    %s152 = scalar_lea.vmem %s151, 7 [#allocation0]
    %v153 = vld [vmem:[%s152] ss:$-1 sm:$0xff]
    %v154 = vrot.slane %v153, 1
    %155 = vst [vmem:[%s150] sm:$0xff] %v154
    %s156 = scalar_lea.vmem %s151, 8 [#allocation0]
    %s157 = scalar_lea.vmem %s156, 7 [#allocation0]
    %v158 = vld [vmem:[%s157] ss:$-1 sm:$0xff]
    %v159 = vrot.slane %v158, 1
    %v160 = vlaneseq
    %v161 = vshrl.u32 %v160, 7
    %vm162 = vcmp.lt.s32.totalorder %v161, 7
    %163 = vst.msk [vmem:[%s150] sm:$0xff] %vm162, %v159
    %s164 = scalar_lea.vmem [#allocation1], 40
    %s165 = scalar_lea.vmem [#allocation0], 80
    %s166 = scalar_lea.vmem %s165, 7 [#allocation0]
    %v167 = vld [vmem:[%s166] ss:$-1 sm:$0xff]
    %v168 = vrot.slane %v167, 1
    %169 = vst [vmem:[%s164] sm:$0xff] %v168
    %s170 = scalar_lea.vmem %s165, 8 [#allocation0]
    %s171 = scalar_lea.vmem %s170, 7 [#allocation0]
    %v172 = vld [vmem:[%s171] ss:$-1 sm:$0xff]
    %v173 = vrot.slane %v172, 1
    %v174 = vlaneseq
    %v175 = vshrl.u32 %v174, 7
    %vm176 = vcmp.lt.s32.totalorder %v175, 7
    %177 = vst.msk [vmem:[%s164] sm:$0xff] %vm176, %v173
    %s178 = scalar_lea.vmem [#allocation1], 48
    %s179 = scalar_lea.vmem [#allocation0], 96
    %s180 = scalar_lea.vmem %s179, 7 [#allocation0]
    %v181 = vld [vmem:[%s180] ss:$-1 sm:$0xff]
    %v182 = vrot.slane %v181, 1
    %183 = vst [vmem:[%s178] sm:$0xff] %v182
    %s184 = scalar_lea.vmem %s179, 8 [#allocation0]
    %s185 = scalar_lea.vmem %s184, 7 [#allocation0]
    %v186 = vld [vmem:[%s185] ss:$-1 sm:$0xff]
    %v187 = vrot.slane %v186, 1
    %v188 = vlaneseq
    %v189 = vshrl.u32 %v188, 7
    %vm190 = vcmp.lt.s32.totalorder %v189, 7
    %191 = vst.msk [vmem:[%s178] sm:$0xff] %vm190, %v187
    %s192 = scalar_lea.vmem [#allocation1], 56
    %s193 = scalar_lea.vmem [#allocation0], 112
    %s194 = scalar_lea.vmem %s193, 7 [#allocation0]
    %v195 = vld [vmem:[%s194] ss:$-1 sm:$0xff]
    %v196 = vrot.slane %v195, 1
    %197 = vst [vmem:[%s192] sm:$0xff] %v196
    %s198 = scalar_lea.vmem %s193, 8 [#allocation0]
    %s199 = scalar_lea.vmem %s198, 7 [#allocation0]
    %v200 = vld [vmem:[%s199] ss:$-1 sm:$0xff]
    %v201 = vrot.slane %v200, 1
    %v202 = vlaneseq
    %v203 = vshrl.u32 %v202, 7
    %vm204 = vcmp.lt.s32.totalorder %v203, 7
    %205 = vst.msk [vmem:[%s192] sm:$0xff] %vm204, %v201
    %s206 = scalar_lea.vmem [#allocation1], 64
    %s207 = scalar_lea.vmem [#allocation0], 128
    %s208 = scalar_lea.vmem %s207, 7 [#allocation0]
    %v209 = vld [vmem:[%s208] ss:$-1 sm:$0xff]
    %v210 = vrot.slane %v209, 1
    %211 = vst [vmem:[%s206] sm:$0xff] %v210
    %s212 = scalar_lea.vmem %s207, 8 [#allocation0]
    %s213 = scalar_lea.vmem %s212, 7 [#allocation0]
    %v214 = vld [vmem:[%s213] ss:$-1 sm:$0xff]
    %v215 = vrot.slane %v214, 1
    %v216 = vlaneseq
    %v217 = vshrl.u32 %v216, 7
    %vm218 = vcmp.lt.s32.totalorder %v217, 7
    %219 = vst.msk [vmem:[%s206] sm:$0xff] %vm218, %v215
    %s220 = scalar_lea.vmem [#allocation1], 72
    %s221 = scalar_lea.vmem [#allocation0], 144
    %s222 = scalar_lea.vmem %s221, 7 [#allocation0]
    %v223 = vld [vmem:[%s222] ss:$-1 sm:$0xff]
    %v224 = vrot.slane %v223, 1
    %225 = vst [vmem:[%s220] sm:$0xff] %v224
    %s226 = scalar_lea.vmem %s221, 8 [#allocation0]
    %s227 = scalar_lea.vmem %s226, 7 [#allocation0]
    %v228 = vld [vmem:[%s227] ss:$-1 sm:$0xff]
    %v229 = vrot.slane %v228, 1
    %v230 = vlaneseq
    %v231 = vshrl.u32 %v230, 7
    %vm232 = vcmp.lt.s32.totalorder %v231, 7
    %233 = vst.msk [vmem:[%s220] sm:$0xff] %vm232, %v229
    %s234 = scalar_lea.vmem [#allocation1], 80
    %s235 = scalar_lea.vmem [#allocation0], 160
    %s236 = scalar_lea.vmem %s235, 7 [#allocation0]
    %v237 = vld [vmem:[%s236] ss:$-1 sm:$0xff]
    %v238 = vrot.slane %v237, 1
    %239 = vst [vmem:[%s234] sm:$0xff] %v238
    %s240 = scalar_lea.vmem %s235, 8 [#allocation0]
    %s241 = scalar_lea.vmem %s240, 7 [#allocation0]
    %v242 = vld [vmem:[%s241] ss:$-1 sm:$0xff]
    %v243 = vrot.slane %v242, 1
    %v244 = vlaneseq
    %v245 = vshrl.u32 %v244, 7
    %vm246 = vcmp.lt.s32.totalorder %v245, 7
    %247 = vst.msk [vmem:[%s234] sm:$0xff] %vm246, %v243
    %s248 = scalar_lea.vmem [#allocation1], 88
    %s249 = scalar_lea.vmem [#allocation0], 176
    %s250 = scalar_lea.vmem %s249, 7 [#allocation0]
    %v251 = vld [vmem:[%s250] ss:$-1 sm:$0xff]
    %v252 = vrot.slane %v251, 1
    %253 = vst [vmem:[%s248] sm:$0xff] %v252
    %s254 = scalar_lea.vmem %s249, 8 [#allocation0]
    %s255 = scalar_lea.vmem %s254, 7 [#allocation0]
    %v256 = vld [vmem:[%s255] ss:$-1 sm:$0xff]
    %v257 = vrot.slane %v256, 1
    %v258 = vlaneseq
    %v259 = vshrl.u32 %v258, 7
    %vm260 = vcmp.lt.s32.totalorder %v259, 7
    %261 = vst.msk [vmem:[%s248] sm:$0xff] %vm260, %v257
    %s262 = scalar_lea.vmem [#allocation1], 96
    %s263 = scalar_lea.vmem [#allocation0], 192
    %s264 = scalar_lea.vmem %s263, 7 [#allocation0]
    %v265 = vld [vmem:[%s264] ss:$-1 sm:$0xff]
    %v266 = vrot.slane %v265, 1
    %267 = vst [vmem:[%s262] sm:$0xff] %v266
    %s268 = scalar_lea.vmem %s263, 8 [#allocation0]
    %s269 = scalar_lea.vmem %s268, 7 [#allocation0]
    %v270 = vld [vmem:[%s269] ss:$-1 sm:$0xff]
    %v271 = vrot.slane %v270, 1
    %v272 = vlaneseq
    %v273 = vshrl.u32 %v272, 7
    %vm274 = vcmp.lt.s32.totalorder %v273, 7
    %275 = vst.msk [vmem:[%s262] sm:$0xff] %vm274, %v271
    %s276 = scalar_lea.vmem [#allocation1], 104
    %s277 = scalar_lea.vmem [#allocation0], 208
    %s278 = scalar_lea.vmem %s277, 7 [#allocation0]
    %v279 = vld [vmem:[%s278] ss:$-1 sm:$0xff]
    %v280 = vrot.slane %v279, 1
    %281 = vst [vmem:[%s276] sm:$0xff] %v280
    %s282 = scalar_lea.vmem %s277, 8 [#allocation0]
    %s283 = scalar_lea.vmem %s282, 7 [#allocation0]
    %v284 = vld [vmem:[%s283] ss:$-1 sm:$0xff]
    %v285 = vrot.slane %v284, 1
    %v286 = vlaneseq
    %v287 = vshrl.u32 %v286, 7
    %vm288 = vcmp.lt.s32.totalorder %v287, 7
    %289 = vst.msk [vmem:[%s276] sm:$0xff] %vm288, %v285
    %s290 = scalar_lea.vmem [#allocation1], 112
    %s291 = scalar_lea.vmem [#allocation0], 224
    %s292 = scalar_lea.vmem %s291, 7 [#allocation0]
    %v293 = vld [vmem:[%s292] ss:$-1 sm:$0xff]
    %v294 = vrot.slane %v293, 1
    %295 = vst [vmem:[%s290] sm:$0xff] %v294
    %s296 = scalar_lea.vmem %s291, 8 [#allocation0]
    %s297 = scalar_lea.vmem %s296, 7 [#allocation0]
    %v298 = vld [vmem:[%s297] ss:$-1 sm:$0xff]
    %v299 = vrot.slane %v298, 1
    %v300 = vlaneseq
    %v301 = vshrl.u32 %v300, 7
    %vm302 = vcmp.lt.s32.totalorder %v301, 7
    %303 = vst.msk [vmem:[%s290] sm:$0xff] %vm302, %v299
    %s304 = scalar_lea.vmem [#allocation1], 120
    %s305 = scalar_lea.vmem [#allocation0], 240
    %s306 = scalar_lea.vmem %s305, 7 [#allocation0]
    %v307 = vld [vmem:[%s306] ss:$-1 sm:$0xff]
    %v308 = vrot.slane %v307, 1
    %309 = vst [vmem:[%s304] sm:$0xff] %v308
    %s310 = scalar_lea.vmem %s305, 8 [#allocation0]
    %s311 = scalar_lea.vmem %s310, 7 [#allocation0]
    %v312 = vld [vmem:[%s311] ss:$-1 sm:$0xff]
    %v313 = vrot.slane %v312, 1
    %v314 = vlaneseq
    %v315 = vshrl.u32 %v314, 7
    %vm316 = vcmp.lt.s32.totalorder %v315, 7
    %317 = vst.msk [vmem:[%s304] sm:$0xff] %vm316, %v313
    // Predicated region
    $region36: #{reverse.0} parent=1 // pred_check
      _
    $region37: #{reverse.0} parent=1 // pred_check_branch
      %319 = sbr.rel (0) target = $region39
    $region38: #{reverse.0} parent=1 // pred_region
      // Predicated region
      $region40: #{reverse.0} parent=38 // pred_check
        _
      $region41: #{reverse.0} parent=38 // pred_check_branch
        %321 = sbr.rel (0) target = $region43
      $region42: #{reverse.0} parent=38 // pred_region
        // Predicated region
        $region55: #{reverse.0} parent=42 // pred_check
          _
        $region56: #{reverse.0} parent=42 // pred_check_branch
          %367 = sbr.rel (0) target = $region58
        $region57: #{reverse.0} parent=42 // pred_region
          loop: start=0, step=1, limit=1
          $region59: #{reverse.0} parent=57 // loop_pre_header
            _
          $region60: #{reverse.0} parent=57 // loop_header
            %s369 = sphi 0, %s373
            %p370 = scmp.ge.s32.totalorder %s369, 1
            %s374 = sphi [#allocation1], [#allocation1]
            %s375 = sphi %s1, %s1
          $region61: #{reverse.0} parent=57 // loop_header_branch
            %372 = sbr.rel (%p370) target = $region65
          $region62: #{reverse.0} parent=57 // loop_body
            %v376 = vld [vmem:[%s374] sm:$0xff]
            %377 = vst [vmem:[%s375] sm:$0xff] %v376
            %v378 = vld [vmem:[%s374 + $0x8] sm:$0xff]
            %379 = vst [vmem:[%s375 + $0x8] sm:$0xff] %v378
            %v380 = vld [vmem:[%s374 + $0x10] sm:$0xff]
            %381 = vst [vmem:[%s375 + $0x10] sm:$0xff] %v380
            %v382 = vld [vmem:[%s374 + $0x18] sm:$0xff]
            %383 = vst [vmem:[%s375 + $0x18] sm:$0xff] %v382
            %v384 = vld [vmem:[%s374 + $0x20] sm:$0xff]
            %385 = vst [vmem:[%s375 + $0x20] sm:$0xff] %v384
            %v386 = vld [vmem:[%s374 + $0x28] sm:$0xff]
            %387 = vst [vmem:[%s375 + $0x28] sm:$0xff] %v386
            %v388 = vld [vmem:[%s374 + $0x30] sm:$0xff]
            %389 = vst [vmem:[%s375 + $0x30] sm:$0xff] %v388
            %v390 = vld [vmem:[%s374 + $0x38] sm:$0xff]
            %391 = vst [vmem:[%s375 + $0x38] sm:$0xff] %v390
            %v392 = vld [vmem:[%s374 + $0x40] sm:$0xff]
            %393 = vst [vmem:[%s375 + $0x40] sm:$0xff] %v392
            %v394 = vld [vmem:[%s374 + $0x48] sm:$0xff]
            %395 = vst [vmem:[%s375 + $0x48] sm:$0xff] %v394
            %v396 = vld [vmem:[%s374 + $0x50] sm:$0xff]
            %397 = vst [vmem:[%s375 + $0x50] sm:$0xff] %v396
            %v398 = vld [vmem:[%s374 + $0x58] sm:$0xff]
            %399 = vst [vmem:[%s375 + $0x58] sm:$0xff] %v398
            %v400 = vld [vmem:[%s374 + $0x60] sm:$0xff]
            %401 = vst [vmem:[%s375 + $0x60] sm:$0xff] %v400
            %v402 = vld [vmem:[%s374 + $0x68] sm:$0xff]
            %403 = vst [vmem:[%s375 + $0x68] sm:$0xff] %v402
            %v404 = vld [vmem:[%s374 + $0x70] sm:$0xff]
            %405 = vst [vmem:[%s375 + $0x70] sm:$0xff] %v404
            %v406 = vld [vmem:[%s374 + $0x78] sm:$0xff]
            %407 = vst [vmem:[%s375 + $0x78] sm:$0xff] %v406
          $region63: #{reverse.0} parent=57 // loop_footer
            %s373 = sadd.s32 1, %s369
          $region64: #{reverse.0} parent=57 // loop_footer_branch
            %368 = sbr.rel target = $region60
          $region65: #{reverse.0} parent=57 // loop_exit
            _
        $region58: #{reverse.0} parent=42 // pred_fallthru
          _
        // Predicated region
        $region66: #{reverse.0} parent=42 // pred_check
          _
        $region67: #{reverse.0} parent=42 // pred_check_branch
          %409 = sbr.rel target = $region69
        $region68: #{reverse.0} parent=42 // pred_region
          _
        $region69: #{reverse.0} parent=42 // pred_fallthru
          _
      $region43: #{reverse.0} parent=38 // pred_fallthru
        _
      // Predicated region
      $region44: #{reverse.0} parent=38 // pred_check
        _
      $region45: #{reverse.0} parent=38 // pred_check_branch
        %323 = sbr.rel target = $region47
      $region46: #{reverse.0} parent=38 // pred_region
        %s325 = ssub.s32 256, 1
        loop: start=0, step=1, limit=1
        $region48: #{reverse.0} parent=46 // loop_pre_header
          _
        $region49: #{reverse.0} parent=46 // loop_header
          %s327 = sphi 0, %s331
          %p328 = scmp.ge.s32.totalorder %s327, 1
          %s332 = sphi [#allocation1], [#allocation1]
          %s333 = sphi %s1, %s1
        $region50: #{reverse.0} parent=46 // loop_header_branch
          %330 = sbr.rel (%p328) target = $region54
        $region51: #{reverse.0} parent=46 // loop_body
          %v334 = vld [vmem:[%s332] sm:%s325]
          %335 = vst [vmem:[%s333] sm:%s325] %v334
          %v336 = vld [vmem:[%s332 + $0x8] sm:%s325]
          %337 = vst [vmem:[%s333 + $0x8] sm:%s325] %v336
          %v338 = vld [vmem:[%s332 + $0x10] sm:%s325]
          %339 = vst [vmem:[%s333 + $0x10] sm:%s325] %v338
          %v340 = vld [vmem:[%s332 + $0x18] sm:%s325]
          %341 = vst [vmem:[%s333 + $0x18] sm:%s325] %v340
          %v342 = vld [vmem:[%s332 + $0x20] sm:%s325]
          %343 = vst [vmem:[%s333 + $0x20] sm:%s325] %v342
          %v344 = vld [vmem:[%s332 + $0x28] sm:%s325]
          %345 = vst [vmem:[%s333 + $0x28] sm:%s325] %v344
          %v346 = vld [vmem:[%s332 + $0x30] sm:%s325]
          %347 = vst [vmem:[%s333 + $0x30] sm:%s325] %v346
          %v348 = vld [vmem:[%s332 + $0x38] sm:%s325]
          %349 = vst [vmem:[%s333 + $0x38] sm:%s325] %v348
          %v350 = vld [vmem:[%s332 + $0x40] sm:%s325]
          %351 = vst [vmem:[%s333 + $0x40] sm:%s325] %v350
          %v352 = vld [vmem:[%s332 + $0x48] sm:%s325]
          %353 = vst [vmem:[%s333 + $0x48] sm:%s325] %v352
          %v354 = vld [vmem:[%s332 + $0x50] sm:%s325]
          %355 = vst [vmem:[%s333 + $0x50] sm:%s325] %v354
          %v356 = vld [vmem:[%s332 + $0x58] sm:%s325]
          %357 = vst [vmem:[%s333 + $0x58] sm:%s325] %v356
          %v358 = vld [vmem:[%s332 + $0x60] sm:%s325]
          %359 = vst [vmem:[%s333 + $0x60] sm:%s325] %v358
          %v360 = vld [vmem:[%s332 + $0x68] sm:%s325]
          %361 = vst [vmem:[%s333 + $0x68] sm:%s325] %v360
          %v362 = vld [vmem:[%s332 + $0x70] sm:%s325]
          %363 = vst [vmem:[%s333 + $0x70] sm:%s325] %v362
          %v364 = vld [vmem:[%s332 + $0x78] sm:%s325]
          %365 = vst [vmem:[%s333 + $0x78] sm:%s325] %v364
        $region52: #{reverse.0} parent=46 // loop_footer
          %s331 = sadd.s32 1, %s327
        $region53: #{reverse.0} parent=46 // loop_footer_branch
          %326 = sbr.rel target = $region49
        $region54: #{reverse.0} parent=46 // loop_exit
          _
      $region47: #{reverse.0} parent=38 // pred_fallthru
        _
    $region39: #{reverse.0} parent=1 // pred_fallthru
      _
    %410 = vnop

// kernel: vsmodel_forward.3
$region0: #{vsmodel_forward.3}
  #allocation0 [shape = 'u32[]', space=smem, size = 0x4, offset = 0x4, fixed_abs, tag = 'smem constant byte address 0x4 - core index']
  #allocation1 [shape = 'u32[72,128]{1,0:T(1,128)}', space=vmem, size = 0x9000, scoped, tag = 'internal scratch']
  #allocation2 [shape = 'f32[1]{0:T(128)S(6)}', space=smem, size = 0x200, scoped, tag = 'scoped memory for vsmodel_forward.3']
  #allocation3 [shape = 'f32[1]{0:T(128)S(6)}', space=smem, size = 0x200, scoped, tag = 'scoped memory for vsmodel_forward.3']
  %s0 = inlined_call_operand.vmem [shape: f32[2,16,128], index: 0, kind: input, shape index: {}]
  %s1 = inlined_call_operand.<no memory space> [shape: f32[1], index: 1, kind: input, shape index: {}]
  %s2 = inlined_call_operand.vmem [shape: f32[32], index: 2, kind: input, shape index: {}]
  %s3 = inlined_call_operand.vmem [shape: f32[32], index: 3, kind: input, shape index: {}]
  %s4 = inlined_call_operand.vmem [shape: f32[32], index: 4, kind: input, shape index: {}]
  %s5 = inlined_call_operand.<no memory space> [shape: f32[1], index: 5, kind: input, shape index: {}]
  %s6 = inlined_call_operand.vmem [shape: f32[2,16,128], index: 6, kind: output, shape index: {}]
  %s7 = sld [smem:[#allocation0]]
  $region69: #{vsmodel_forward.3} parent=0
    _
  %s9 = ssub.s32 1, %s7
  %s10 = scalar_select 0, %s9, %s7
  %11 = sst [smem:[#allocation2]] %s1
  %12 = sst [smem:[#allocation3]] %s5
  $region1: #{vsmodel_forward.3} parent=0
    #allocation4 [shape = 'u8[512]{0}', space=smem, size = 0x200, scoped, tag = 'input window, operand 2, single buffered']
    #allocation5 [shape = 's32[2]{0}', space=sflag, size = 0x8, scoped, tag = 'scoped memory for vsmodel_forward.3']
    #allocation6 [shape = 'u8[512]{0}', space=smem, size = 0x200, scoped, tag = 'input window, operand 3, single buffered']
    #allocation7 [shape = 's32[1]{0}', space=sflag, size = 0x4, scoped, tag = 'scoped memory for vsmodel_forward.3']
    #allocation8 [shape = 'u8[512]{0}', space=smem, size = 0x200, scoped, tag = 'input window, operand 4, single buffered']
    %13 = vsyncpa [#allocation5], 0
    %14 = vsyncpa [#allocation7], 0
    loop: start=0, step=1, limit=4
    $region2: #{vsmodel_forward.3} parent=1 // loop_pre_header
      _
    $region3: #{vsmodel_forward.3} parent=1 // loop_header
      %s16 = sphi 0, %s20
      %p17 = scmp.ge.s32.totalorder %s16, 4
      %s23 = sphi 0, %s35
      %s24 = sphi 0, %s31
      %s25 = sphi 0, %s23
      %s26 = sphi 0, %s24
      %s27 = sphi 0, %s25
      %s28 = sphi 0, %s26
      %s40 = sphi 0, %s42
      %s43 = sphi 0, %s40
      %s44 = sphi 0, %s43
      %s60 = sphi 0, %s44
      %s64 = sphi 0, %s64
      %s66 = sphi 0, %s64
      %s67 = sphi 0, %s66
      %s81 = sphi 0, %s67
      %s85 = sphi 0, %s85
      %s87 = sphi 0, %s85
      %s88 = sphi 0, %s87
      %s102 = sphi 0, %s88
      %s106 = sphi 0, %s106
      %s108 = sphi 0, %s106
      %s109 = sphi 0, %s108
      %s123 = sphi 0, %s109
      %s127 = sphi 0, %s127
      %s129 = sphi 0, %s127
      %s130 = sphi 0, %s129
      %s144 = sphi 0, %s130
      %s148 = sphi 0, %s148
      %s150 = sphi 0, %s148
      %s151 = sphi 0, %s150
      %s165 = sphi 0, %s151
      %s173 = sphi 0, %s175
      %s176 = sphi 0, %s173
      %s177 = sphi 0, %s176
      %s193 = sphi 0, %s177
    $region4: #{vsmodel_forward.3} parent=1 // loop_header_branch
      %19 = sbr.rel (%p17) target = $region8
    $region5: #{vsmodel_forward.3} parent=1 // loop_body
      %s21 = ssub.s32 %s16, 1
      %s22 = ssub.s32 %s16, 2
      %s29 = sadd.s32 1, %s24
      %p30 = scmp.ge.s32.totalorder %s29, 1
      %s31 = scalar_select %p30, 0, %s29
      %s32 = sadd.s32 1, %s23
      %s33 = scalar_select %p30, %s32, %s23
      %p34 = scmp.ge.s32.totalorder %s33, 2
      %s35 = scalar_select %p34, 0, %s33
      %s36 = ssub.s32 %s23, %s35
      %s37 = ssub.s32 %s24, %s31
      %s38 = sor.u32 %s36, %s37
      %p39 = scmp.eq.s32.totalorder %s38, 0
      %s41 = sadd.s32 %s40, 1
      %s42 = scalar_select %p39, %s40, %s41
      %p45 = pneg %p39
      %p46 = scmp.eq.s32.totalorder %s16, 1
      %p47 = por %p45, %p46
      %p48 = scmp.ne.s32.totalorder %s40, %s43
      %p49 = scmp.eq.s32.totalorder %s16, 0
      %p50 = por %p48, %p49
      %p51 = scmp.ne.s32.totalorder %s40, %s43
      %p52 = scmp.eq.s32.totalorder %s21, 1
      %p53 = por %p51, %p52
      %p54 = scmp.ne.s32.totalorder %s43, %s44
      %p55 = scmp.eq.s32.totalorder %s21, 0
      %p56 = por %p54, %p55
      %p57 = scmp.ne.s32.totalorder %s43, %s44
      %p58 = scmp.eq.s32.totalorder %s22, 1
      %p59 = por %p57, %p58
      %p61 = scmp.ne.s32.totalorder %s44, %s60
      %p62 = scmp.eq.s32.totalorder %s22, 0
      %p63 = por %p61, %p62
      %s65 = sadd.s32 %s64, 1
      %p68 = scmp.eq.s32.totalorder %s16, 1
      %p69 = scmp.ne.s32.totalorder %s64, %s66
      %p70 = scmp.eq.s32.totalorder %s16, 0
      %p71 = por %p69, %p70
      %p72 = scmp.ne.s32.totalorder %s64, %s66
      %p73 = scmp.eq.s32.totalorder %s21, 1
      %p74 = por %p72, %p73
      %p75 = scmp.ne.s32.totalorder %s66, %s67
      %p76 = scmp.eq.s32.totalorder %s21, 0
      %p77 = por %p75, %p76
      %p78 = scmp.ne.s32.totalorder %s66, %s67
      %p79 = scmp.eq.s32.totalorder %s22, 1
      %p80 = por %p78, %p79
      %p82 = scmp.ne.s32.totalorder %s67, %s81
      %p83 = scmp.eq.s32.totalorder %s22, 0
      %p84 = por %p82, %p83
      %s86 = sadd.s32 %s85, 1
      %p89 = scmp.eq.s32.totalorder %s16, 1
      %p90 = scmp.ne.s32.totalorder %s85, %s87
      %p91 = scmp.eq.s32.totalorder %s16, 0
      %p92 = por %p90, %p91
      %p93 = scmp.ne.s32.totalorder %s85, %s87
      %p94 = scmp.eq.s32.totalorder %s21, 1
      %p95 = por %p93, %p94
      %p96 = scmp.ne.s32.totalorder %s87, %s88
      %p97 = scmp.eq.s32.totalorder %s21, 0
      %p98 = por %p96, %p97
      %p99 = scmp.ne.s32.totalorder %s87, %s88
      %p100 = scmp.eq.s32.totalorder %s22, 1
      %p101 = por %p99, %p100
      %p103 = scmp.ne.s32.totalorder %s88, %s102
      %p104 = scmp.eq.s32.totalorder %s22, 0
      %p105 = por %p103, %p104
      %s107 = sadd.s32 %s106, 1
      %p110 = scmp.eq.s32.totalorder %s16, 1
      %p111 = scmp.ne.s32.totalorder %s106, %s108
      %p112 = scmp.eq.s32.totalorder %s16, 0
      %p113 = por %p111, %p112
      %p114 = scmp.ne.s32.totalorder %s106, %s108
      %p115 = scmp.eq.s32.totalorder %s21, 1
      %p116 = por %p114, %p115
      %p117 = scmp.ne.s32.totalorder %s108, %s109
      %p118 = scmp.eq.s32.totalorder %s21, 0
      %p119 = por %p117, %p118
      %p120 = scmp.ne.s32.totalorder %s108, %s109
      %p121 = scmp.eq.s32.totalorder %s22, 1
      %p122 = por %p120, %p121
      %p124 = scmp.ne.s32.totalorder %s109, %s123
      %p125 = scmp.eq.s32.totalorder %s22, 0
      %p126 = por %p124, %p125
      %s128 = sadd.s32 %s127, 1
      %p131 = scmp.eq.s32.totalorder %s16, 1
      %p132 = scmp.ne.s32.totalorder %s127, %s129
      %p133 = scmp.eq.s32.totalorder %s16, 0
      %p134 = por %p132, %p133
      %p135 = scmp.ne.s32.totalorder %s127, %s129
      %p136 = scmp.eq.s32.totalorder %s21, 1
      %p137 = por %p135, %p136
      %p138 = scmp.ne.s32.totalorder %s129, %s130
      %p139 = scmp.eq.s32.totalorder %s21, 0
      %p140 = por %p138, %p139
      %p141 = scmp.ne.s32.totalorder %s129, %s130
      %p142 = scmp.eq.s32.totalorder %s22, 1
      %p143 = por %p141, %p142
      %p145 = scmp.ne.s32.totalorder %s130, %s144
      %p146 = scmp.eq.s32.totalorder %s22, 0
      %p147 = por %p145, %p146
      %s149 = sadd.s32 %s148, 1
      %p152 = scmp.eq.s32.totalorder %s16, 1
      %p153 = scmp.ne.s32.totalorder %s148, %s150
      %p154 = scmp.eq.s32.totalorder %s16, 0
      %p155 = por %p153, %p154
      %p156 = scmp.ne.s32.totalorder %s148, %s150
      %p157 = scmp.eq.s32.totalorder %s21, 1
      %p158 = por %p156, %p157
      %p159 = scmp.ne.s32.totalorder %s150, %s151
      %p160 = scmp.eq.s32.totalorder %s21, 0
      %p161 = por %p159, %p160
      %p162 = scmp.ne.s32.totalorder %s150, %s151
      %p163 = scmp.eq.s32.totalorder %s22, 1
      %p164 = por %p162, %p163
      %p166 = scmp.ne.s32.totalorder %s151, %s165
      %p167 = scmp.eq.s32.totalorder %s22, 0
      %p168 = por %p166, %p167
      %s169 = ssub.s32 %s23, %s35
      %s170 = ssub.s32 %s24, %s31
      %s171 = sor.u32 %s169, %s170
      %p172 = scmp.eq.s32.totalorder %s171, 0
      %s174 = sadd.s32 %s173, 1
      %s175 = scalar_select %p172, %s173, %s174
      %p178 = pneg %p172
      %p179 = scmp.eq.s32.totalorder %s16, 1
      %p180 = por %p178, %p179
      %p181 = scmp.ne.s32.totalorder %s173, %s176
      %p182 = scmp.eq.s32.totalorder %s16, 0
      %p183 = por %p181, %p182
      %p184 = scmp.ne.s32.totalorder %s173, %s176
      %p185 = scmp.eq.s32.totalorder %s21, 1
      %p186 = por %p184, %p185
      %p187 = scmp.ne.s32.totalorder %s176, %s177
      %p188 = scmp.eq.s32.totalorder %s21, 0
      %p189 = por %p187, %p188
      %p190 = scmp.ne.s32.totalorder %s176, %s177
      %p191 = scmp.eq.s32.totalorder %s22, 1
      %p192 = por %p190, %p191
      %p194 = scmp.ne.s32.totalorder %s177, %s193
      %p195 = scmp.eq.s32.totalorder %s22, 0
      %p196 = por %p194, %p195
      %p197 = scmp.le.s32.totalorder 1, %s16
      %p198 = scmp.lt.s32.totalorder %s16, 3
      %p199 = pnand %p197, %p198
      %p200 = pneg %p199
      // Predicated region
      $region9: #{vsmodel_forward.3} parent=5 // pred_check
        _
      $region10: #{vsmodel_forward.3} parent=5 // pred_check_branch
        %202 = sbr.rel (%p199) target = $region12
      $region11: #{vsmodel_forward.3} parent=5 // pred_region
        %s203 = ssub.s32 %s16, 1
        // Predicated region
        $region13: #{vsmodel_forward.3} parent=11 // pred_check
          %p204 = pneg %p77
        $region14: #{vsmodel_forward.3} parent=11 // pred_check_branch
          %206 = sbr.rel (%p204) target = $region16
        $region15: #{vsmodel_forward.3} parent=11 // pred_region
          _
        $region16: #{vsmodel_forward.3} parent=11 // pred_fallthru
          _
        // Predicated region
        $region17: #{vsmodel_forward.3} parent=11 // pred_check
          %p207 = pneg %p98
        $region18: #{vsmodel_forward.3} parent=11 // pred_check_branch
          %209 = sbr.rel (%p207) target = $region20
        $region19: #{vsmodel_forward.3} parent=11 // pred_region
          %211 = vsyncadd [#allocation5], 0
          %s213 = sshll.u32 %s2, 4
          %s214 = int_to_ptr.vmem [resolvable:$true] %s213
          %216 = dma.vmem_to_smem %s214, 16, [#allocation4], [#allocation5]
        $region20: #{vsmodel_forward.3} parent=11 // pred_fallthru
          _
        // Predicated region
        $region21: #{vsmodel_forward.3} parent=11 // pred_check
          %p217 = pneg %p119
        $region22: #{vsmodel_forward.3} parent=11 // pred_check_branch
          %219 = sbr.rel (%p217) target = $region24
        $region23: #{vsmodel_forward.3} parent=11 // pred_region
          %221 = vsyncadd [#allocation7], 0
          %s223 = sshll.u32 %s3, 4
          %s224 = int_to_ptr.vmem [resolvable:$true] %s223
          %226 = dma.vmem_to_smem %s224, 16, [#allocation6], [#allocation7]
        $region24: #{vsmodel_forward.3} parent=11 // pred_fallthru
          _
        // Predicated region
        $region25: #{vsmodel_forward.3} parent=11 // pred_check
          %p227 = pneg %p140
        $region26: #{vsmodel_forward.3} parent=11 // pred_check_branch
          %229 = sbr.rel (%p227) target = $region28
        $region27: #{vsmodel_forward.3} parent=11 // pred_region
          %231 = vsyncadd [#allocation7], 0
          %s233 = sshll.u32 %s4, 4
          %s234 = int_to_ptr.vmem [resolvable:$true] %s233
          %236 = dma.vmem_to_smem %s234, 16, [#allocation8], [#allocation7]
        $region28: #{vsmodel_forward.3} parent=11 // pred_fallthru
          _
        // Predicated region
        $region29: #{vsmodel_forward.3} parent=11 // pred_check
          %p237 = pneg %p161
        $region30: #{vsmodel_forward.3} parent=11 // pred_check_branch
          %239 = sbr.rel (%p237) target = $region32
        $region31: #{vsmodel_forward.3} parent=11 // pred_region
          _
        $region32: #{vsmodel_forward.3} parent=11 // pred_fallthru
          _
      $region12: #{vsmodel_forward.3} parent=5 // pred_fallthru
        _
      %p240 = scmp.lt.s32.totalorder %s16, 2
      // Predicated region
      $region33: #{vsmodel_forward.3} parent=5 // pred_check
        %p241 = pneg %p240
      $region34: #{vsmodel_forward.3} parent=5 // pred_check_branch
        %243 = sbr.rel (%p241) target = $region36
      $region35: #{vsmodel_forward.3} parent=5 // pred_region
        // Predicated region
        $region37: #{vsmodel_forward.3} parent=35 // pred_check
          %p244 = pneg %p50
        $region38: #{vsmodel_forward.3} parent=35 // pred_check_branch
          %246 = sbr.rel (%p244) target = $region40
        $region39: #{vsmodel_forward.3} parent=35 // pred_region
          %s247 = smul.u32 2, %s24
          %p248 = scmp.lt.s32.totalorder %s23, 1
          %s249 = scalar_select %p248, %s23, 1
          %p250 = scmp.lt.s32.totalorder %s247, 1
          %s251 = scalar_select %p250, %s247, 1
          %s252 = smul.addr %s249, 2
          %s253 = sadd.s32 %s251, %s252
          %s254 = smul.addr %s253, 8
          %s255 = scalar_lea.vmem %s0, %s254
          %s256 = smul.u32 2, %s24
        $region40: #{vsmodel_forward.3} parent=35 // pred_fallthru
          _
      $region36: #{vsmodel_forward.3} parent=5 // pred_fallthru
        _
      %p257 = scmp.le.s32.totalorder 1, %s16
      %p258 = scmp.lt.s32.totalorder %s16, 3
      %p259 = pnand %p257, %p258
      %p260 = pneg %p259
      // Predicated region
      $region41: #{vsmodel_forward.3} parent=5 // pred_check
        _
      $region42: #{vsmodel_forward.3} parent=5 // pred_check_branch
        %262 = sbr.rel (%p259) target = $region44
      $region43: #{vsmodel_forward.3} parent=5 // pred_region
        %s263 = ssub.s32 %s16, 1
        // Predicated region
        $region45: #{vsmodel_forward.3} parent=43 // pred_check
          %p264 = pneg %p98
        $region46: #{vsmodel_forward.3} parent=43 // pred_check_branch
          %266 = sbr.rel (%p264) target = $region48
        $region47: #{vsmodel_forward.3} parent=43 // pred_region
          %268 = dma.done [#allocation5], 16
        $region48: #{vsmodel_forward.3} parent=43 // pred_fallthru
          _
        // Predicated region
        $region49: #{vsmodel_forward.3} parent=43 // pred_check
          %p269 = pneg %p119
        $region50: #{vsmodel_forward.3} parent=43 // pred_check_branch
          %271 = sbr.rel (%p269) target = $region52
        $region51: #{vsmodel_forward.3} parent=43 // pred_region
          %273 = dma.done [#allocation7], 16
        $region52: #{vsmodel_forward.3} parent=43 // pred_fallthru
          _
        // Predicated region
        $region53: #{vsmodel_forward.3} parent=43 // pred_check
          %p274 = pneg %p140
        $region54: #{vsmodel_forward.3} parent=43 // pred_check_branch
          %276 = sbr.rel (%p274) target = $region56
        $region55: #{vsmodel_forward.3} parent=43 // pred_region
          %278 = dma.done [#allocation7], 16
        $region56: #{vsmodel_forward.3} parent=43 // pred_fallthru
          _
        %279 = sfence
        %s280 = smul.u32 2, %s26
        %p281 = scmp.lt.s32.totalorder %s25, 1
        %s282 = scalar_select %p281, %s25, 1
        %p283 = scmp.lt.s32.totalorder %s280, 1
        %s284 = scalar_select %p283, %s280, 1
        %s285 = smul.addr %s282, 2
        %s286 = sadd.s32 %s284, %s285
        %s287 = smul.addr %s286, 8
        %s288 = scalar_lea.vmem %s0, %s287
        %p289 = pneg %p56
        %p290 = pneg %p53
        %p291 = pneg %p77
        %p292 = pneg %p74
        %p293 = pneg %p98
        %p294 = pneg %p95
        %p295 = pneg %p119
        %p296 = pneg %p116
        %p297 = pneg %p140
        %p298 = pneg %p137
        %p299 = pneg %p161
        %p300 = pneg %p158
        %p301 = pneg %p189
        %p302 = pneg %p186
        %s303 = smul.u32 2, %s26
        %p304 = scmp.lt.s32.totalorder %s25, 1
        %s305 = scalar_select %p304, %s25, 1
        %p306 = scmp.lt.s32.totalorder %s303, 1
        %s307 = scalar_select %p306, %s303, 1
        %s308 = smul.addr %s305, 2
        %s309 = sadd.s32 %s307, %s308
        %s310 = smul.addr %s309, 8
        %s311 = scalar_lea.vmem %s6, %s310
        %s312 = smul.u32 2, %s26
        %p313 = scmp.lt.s32.totalorder %s25, 1
        %s314 = scalar_select %p313, %s25, 1
        %p315 = scmp.lt.s32.totalorder %s312, 1
        %s316 = scalar_select %p315, %s312, 1
        %s317 = smul.addr %s314, 2
        %s318 = sadd.s32 %s316, %s317
        %s319 = smul.addr %s318, 8
        %s320 = scalar_lea.vmem %s0, %s319
        %s321 = smul.u32 2, %s26
        %s322 = smul.u32 2, %s26
        %p323 = scmp.lt.s32.totalorder %s25, 1
        %s324 = scalar_select %p323, %s25, 1
        %p325 = scmp.lt.s32.totalorder %s322, 1
        %s326 = scalar_select %p325, %s322, 1
        %s327 = smul.addr %s324, 2
        %s328 = sadd.s32 %s326, %s327
        %s329 = smul.addr %s328, 8
        %s330 = scalar_lea.vmem %s6, %s329
        %s331 = smul.u32 2, %s26
        %v332 = vld [vmem:[%s320] sm:$0xff]
        %v333 = vld [vmem:[%s320 + $0x8] sm:$0xff]
        %v334 = vmax.f32 %v332, 0.0
        %v335 = vmax.f32 %v333, 0.0
        %s336 = sld [smem:[#allocation2]]
        %v337 = vstv %s336
        %v338 = vmul.f32 %v334, %v337
        %v339 = vmul.f32 %v335, %v337
        %s340 = sld [smem:[#allocation8]]
        %s341 = sld [smem:[#allocation4]]
        %v342 = vstv %s341
        %v343 = vmul.f32 %v342, %v338
        %v344 = vmul.f32 %v342, %v339
        %s345 = sld [smem:[#allocation6]]
        %v346 = vstv %s345
        %v347 = vadd.f32 %v343, %v346
        %v348 = vadd.f32 %v344, %v346
        %v349 = vmax.f32 %v347, 0.0
        %v350 = vmax.f32 %v348, 0.0
        %v351 = vstv %s340
        %v352 = vmul.f32 %v351, %v349
        %v353 = vmul.f32 %v351, %v350
        %v354 = vadd.f32 %v352, 0.0
        %v355 = vadd.f32 %v353, 0.0
        %s356 = sld [smem:[#allocation8 + $0x1]]
        %s357 = sld [smem:[#allocation4 + $0x1]]
        %v358 = vstv %s357
        %v359 = vmul.f32 %v358, %v338
        %v360 = vmul.f32 %v358, %v339
        %s361 = sld [smem:[#allocation6 + $0x1]]
        %v362 = vstv %s361
        %v363 = vadd.f32 %v359, %v362
        %v364 = vadd.f32 %v360, %v362
        %v365 = vmax.f32 %v363, 0.0
        %v366 = vmax.f32 %v364, 0.0
        %v367 = vstv %s356
        %v368 = vmul.f32 %v367, %v365
        %v369 = vmul.f32 %v367, %v366
        %v370 = vadd.f32 %v354, %v368
        %v371 = vadd.f32 %v355, %v369
        %s372 = sld [smem:[#allocation8 + $0x2]]
        %s373 = sld [smem:[#allocation4 + $0x2]]
        %v374 = vstv %s373
        %v375 = vmul.f32 %v374, %v338
        %v376 = vmul.f32 %v374, %v339
        %s377 = sld [smem:[#allocation6 + $0x2]]
        %v378 = vstv %s377
        %v379 = vadd.f32 %v375, %v378
        %v380 = vadd.f32 %v376, %v378
        %v381 = vmax.f32 %v379, 0.0
        %v382 = vmax.f32 %v380, 0.0
        %v383 = vstv %s372
        %v384 = vmul.f32 %v383, %v381
        %v385 = vmul.f32 %v383, %v382
        %v386 = vadd.f32 %v370, %v384
        %v387 = vadd.f32 %v371, %v385
        %s388 = sld [smem:[#allocation8 + $0x3]]
        %s389 = sld [smem:[#allocation4 + $0x3]]
        %v390 = vstv %s389
        %v391 = vmul.f32 %v390, %v338
        %v392 = vmul.f32 %v390, %v339
        %s393 = sld [smem:[#allocation6 + $0x3]]
        %v394 = vstv %s393
        %v395 = vadd.f32 %v391, %v394
        %v396 = vadd.f32 %v392, %v394
        %v397 = vmax.f32 %v395, 0.0
        %v398 = vmax.f32 %v396, 0.0
        %v399 = vstv %s388
        %v400 = vmul.f32 %v399, %v397
        %v401 = vmul.f32 %v399, %v398
        %v402 = vadd.f32 %v386, %v400
        %v403 = vadd.f32 %v387, %v401
        %s404 = sld [smem:[#allocation8 + $0x4]]
        %s405 = sld [smem:[#allocation4 + $0x4]]
        %v406 = vstv %s405
        %v407 = vmul.f32 %v406, %v338
        %v408 = vmul.f32 %v406, %v339
        %s409 = sld [smem:[#allocation6 + $0x4]]
        %v410 = vstv %s409
        %v411 = vadd.f32 %v407, %v410
        %v412 = vadd.f32 %v408, %v410
        %v413 = vmax.f32 %v411, 0.0
        %v414 = vmax.f32 %v412, 0.0
        %v415 = vstv %s404
        %v416 = vmul.f32 %v415, %v413
        %v417 = vmul.f32 %v415, %v414
        %v418 = vadd.f32 %v402, %v416
        %v419 = vadd.f32 %v403, %v417
        %s420 = sld [smem:[#allocation8 + $0x5]]
        %s421 = sld [smem:[#allocation4 + $0x5]]
        %v422 = vstv %s421
        %v423 = vmul.f32 %v422, %v338
        %v424 = vmul.f32 %v422, %v339
        %s425 = sld [smem:[#allocation6 + $0x5]]
        %v426 = vstv %s425
        %v427 = vadd.f32 %v423, %v426
        %v428 = vadd.f32 %v424, %v426
        %v429 = vmax.f32 %v427, 0.0
        %v430 = vmax.f32 %v428, 0.0
        %v431 = vstv %s420
        %v432 = vmul.f32 %v431, %v429
        %v433 = vmul.f32 %v431, %v430
        %v434 = vadd.f32 %v418, %v432
        %v435 = vadd.f32 %v419, %v433
        %s436 = sld [smem:[#allocation8 + $0x6]]
        %s437 = sld [smem:[#allocation4 + $0x6]]
        %v438 = vstv %s437
        %v439 = vmul.f32 %v438, %v338
        %v440 = vmul.f32 %v438, %v339
        %s441 = sld [smem:[#allocation6 + $0x6]]
        %v442 = vstv %s441
        %v443 = vadd.f32 %v439, %v442
        %v444 = vadd.f32 %v440, %v442
        %v445 = vmax.f32 %v443, 0.0
        %v446 = vmax.f32 %v444, 0.0
        %v447 = vstv %s436
        %v448 = vmul.f32 %v447, %v445
        %v449 = vmul.f32 %v447, %v446
        %v450 = vadd.f32 %v434, %v448
        %v451 = vadd.f32 %v435, %v449
        %s452 = sld [smem:[#allocation8 + $0x7]]
        %s453 = sld [smem:[#allocation4 + $0x7]]
        %v454 = vstv %s453
        %v455 = vmul.f32 %v454, %v338
        %v456 = vmul.f32 %v454, %v339
        %s457 = sld [smem:[#allocation6 + $0x7]]
        %v458 = vstv %s457
        %v459 = vadd.f32 %v455, %v458
        %v460 = vadd.f32 %v456, %v458
        %v461 = vmax.f32 %v459, 0.0
        %v462 = vmax.f32 %v460, 0.0
        %v463 = vstv %s452
        %v464 = vmul.f32 %v463, %v461
        %v465 = vmul.f32 %v463, %v462
        %v466 = vadd.f32 %v450, %v464
        %v467 = vadd.f32 %v451, %v465
        %s468 = sld [smem:[#allocation8 + $0x8]]
        %s469 = sld [smem:[#allocation4 + $0x8]]
        %v470 = vstv %s469
        %v471 = vmul.f32 %v470, %v338
        %v472 = vmul.f32 %v470, %v339
        %s473 = sld [smem:[#allocation6 + $0x8]]
        %v474 = vstv %s473
        %v475 = vadd.f32 %v471, %v474
        %v476 = vadd.f32 %v472, %v474
        %v477 = vmax.f32 %v475, 0.0
        %v478 = vmax.f32 %v476, 0.0
        %v479 = vstv %s468
        %v480 = vmul.f32 %v479, %v477
        %v481 = vmul.f32 %v479, %v478
        %v482 = vadd.f32 %v466, %v480
        %v483 = vadd.f32 %v467, %v481
        %s484 = sld [smem:[#allocation8 + $0x9]]
        %s485 = sld [smem:[#allocation4 + $0x9]]
        %v486 = vstv %s485
        %v487 = vmul.f32 %v486, %v338
        %v488 = vmul.f32 %v486, %v339
        %s489 = sld [smem:[#allocation6 + $0x9]]
        %v490 = vstv %s489
        %v491 = vadd.f32 %v487, %v490
        %v492 = vadd.f32 %v488, %v490
        %v493 = vmax.f32 %v491, 0.0
        %v494 = vmax.f32 %v492, 0.0
        %v495 = vstv %s484
        %v496 = vmul.f32 %v495, %v493
        %v497 = vmul.f32 %v495, %v494
        %v498 = vadd.f32 %v482, %v496
        %v499 = vadd.f32 %v483, %v497
        %s500 = sld [smem:[#allocation8 + $0xa]]
        %s501 = sld [smem:[#allocation4 + $0xa]]
        %v502 = vstv %s501
        %v503 = vmul.f32 %v502, %v338
        %v504 = vmul.f32 %v502, %v339
        %s505 = sld [smem:[#allocation6 + $0xa]]
        %v506 = vstv %s505
        %v507 = vadd.f32 %v503, %v506
        %v508 = vadd.f32 %v504, %v506
        %v509 = vmax.f32 %v507, 0.0
        %v510 = vmax.f32 %v508, 0.0
        %v511 = vstv %s500
        %v512 = vmul.f32 %v511, %v509
        %v513 = vmul.f32 %v511, %v510
        %v514 = vadd.f32 %v498, %v512
        %v515 = vadd.f32 %v499, %v513
        %s516 = sld [smem:[#allocation8 + $0xb]]
        %s517 = sld [smem:[#allocation4 + $0xb]]
        %v518 = vstv %s517
        %v519 = vmul.f32 %v518, %v338
        %v520 = vmul.f32 %v518, %v339
        %s521 = sld [smem:[#allocation6 + $0xb]]
        %v522 = vstv %s521
        %v523 = vadd.f32 %v519, %v522
        %v524 = vadd.f32 %v520, %v522
        %v525 = vmax.f32 %v523, 0.0
        %v526 = vmax.f32 %v524, 0.0
        %v527 = vstv %s516
        %v528 = vmul.f32 %v527, %v525
        %v529 = vmul.f32 %v527, %v526
        %v530 = vadd.f32 %v514, %v528
        %v531 = vadd.f32 %v515, %v529
        %s532 = sld [smem:[#allocation8 + $0xc]]
        %s533 = sld [smem:[#allocation4 + $0xc]]
        %v534 = vstv %s533
        %v535 = vmul.f32 %v534, %v338
        %v536 = vmul.f32 %v534, %v339
        %s537 = sld [smem:[#allocation6 + $0xc]]
        %v538 = vstv %s537
        %v539 = vadd.f32 %v535, %v538
        %v540 = vadd.f32 %v536, %v538
        %v541 = vmax.f32 %v539, 0.0
        %v542 = vmax.f32 %v540, 0.0
        %v543 = vstv %s532
        %v544 = vmul.f32 %v543, %v541
        %v545 = vmul.f32 %v543, %v542
        %v546 = vadd.f32 %v530, %v544
        %v547 = vadd.f32 %v531, %v545
        %s548 = sld [smem:[#allocation8 + $0xd]]
        %s549 = sld [smem:[#allocation4 + $0xd]]
        %v550 = vstv %s549
        %v551 = vmul.f32 %v550, %v338
        %v552 = vmul.f32 %v550, %v339
        %s553 = sld [smem:[#allocation6 + $0xd]]
        %v554 = vstv %s553
        %v555 = vadd.f32 %v551, %v554
        %v556 = vadd.f32 %v552, %v554
        %v557 = vmax.f32 %v555, 0.0
        %v558 = vmax.f32 %v556, 0.0
        %v559 = vstv %s548
        %v560 = vmul.f32 %v559, %v557
        %v561 = vmul.f32 %v559, %v558
        %v562 = vadd.f32 %v546, %v560
        %v563 = vadd.f32 %v547, %v561
        %s564 = sld [smem:[#allocation8 + $0xe]]
        %s565 = sld [smem:[#allocation4 + $0xe]]
        %v566 = vstv %s565
        %v567 = vmul.f32 %v566, %v338
        %v568 = vmul.f32 %v566, %v339
        %s569 = sld [smem:[#allocation6 + $0xe]]
        %v570 = vstv %s569
        %v571 = vadd.f32 %v567, %v570
        %v572 = vadd.f32 %v568, %v570
        %v573 = vmax.f32 %v571, 0.0
        %v574 = vmax.f32 %v572, 0.0
        %v575 = vstv %s564
        %v576 = vmul.f32 %v575, %v573
        %v577 = vmul.f32 %v575, %v574
        %v578 = vadd.f32 %v562, %v576
        %v579 = vadd.f32 %v563, %v577
        %s580 = sld [smem:[#allocation8 + $0xf]]
        %s581 = sld [smem:[#allocation4 + $0xf]]
        %v582 = vstv %s581
        %v583 = vmul.f32 %v582, %v338
        %v584 = vmul.f32 %v582, %v339
        %s585 = sld [smem:[#allocation6 + $0xf]]
        %v586 = vstv %s585
        %v587 = vadd.f32 %v583, %v586
        %v588 = vadd.f32 %v584, %v586
        %v589 = vmax.f32 %v587, 0.0
        %v590 = vmax.f32 %v588, 0.0
        %v591 = vstv %s580
        %v592 = vmul.f32 %v591, %v589
        %v593 = vmul.f32 %v591, %v590
        %v594 = vadd.f32 %v578, %v592
        %v595 = vadd.f32 %v579, %v593
        %s596 = sld [smem:[#allocation8 + $0x10]]
        %s597 = sld [smem:[#allocation4 + $0x10]]
        %v598 = vstv %s597
        %v599 = vmul.f32 %v598, %v338
        %v600 = vmul.f32 %v598, %v339
        %s601 = sld [smem:[#allocation6 + $0x10]]
        %v602 = vstv %s601
        %v603 = vadd.f32 %v599, %v602
        %v604 = vadd.f32 %v600, %v602
        %v605 = vmax.f32 %v603, 0.0
        %v606 = vmax.f32 %v604, 0.0
        %v607 = vstv %s596
        %v608 = vmul.f32 %v607, %v605
        %v609 = vmul.f32 %v607, %v606
        %v610 = vadd.f32 %v594, %v608
        %v611 = vadd.f32 %v595, %v609
        %s612 = sld [smem:[#allocation8 + $0x11]]
        %s613 = sld [smem:[#allocation4 + $0x11]]
        %v614 = vstv %s613
        %v615 = vmul.f32 %v614, %v338
        %v616 = vmul.f32 %v614, %v339
        %s617 = sld [smem:[#allocation6 + $0x11]]
        %v618 = vstv %s617
        %v619 = vadd.f32 %v615, %v618
        %v620 = vadd.f32 %v616, %v618
        %v621 = vmax.f32 %v619, 0.0
        %v622 = vmax.f32 %v620, 0.0
        %v623 = vstv %s612
        %v624 = vmul.f32 %v623, %v621
        %v625 = vmul.f32 %v623, %v622
        %v626 = vadd.f32 %v610, %v624
        %v627 = vadd.f32 %v611, %v625
        %s628 = sld [smem:[#allocation8 + $0x12]]
        %s629 = sld [smem:[#allocation4 + $0x12]]
        %v630 = vstv %s629
        %v631 = vmul.f32 %v630, %v338
        %v632 = vmul.f32 %v630, %v339
        %s633 = sld [smem:[#allocation6 + $0x12]]
        %v634 = vstv %s633
        %v635 = vadd.f32 %v631, %v634
        %v636 = vadd.f32 %v632, %v634
        %v637 = vmax.f32 %v635, 0.0
        %v638 = vmax.f32 %v636, 0.0
        %v639 = vstv %s628
        %v640 = vmul.f32 %v639, %v637
        %v641 = vmul.f32 %v639, %v638
        %v642 = vadd.f32 %v626, %v640
        %v643 = vadd.f32 %v627, %v641
        %s644 = sld [smem:[#allocation8 + $0x13]]
        %s645 = sld [smem:[#allocation4 + $0x13]]
        %v646 = vstv %s645
        %v647 = vmul.f32 %v646, %v338
        %v648 = vmul.f32 %v646, %v339
        %s649 = sld [smem:[#allocation6 + $0x13]]
        %v650 = vstv %s649
        %v651 = vadd.f32 %v647, %v650
        %v652 = vadd.f32 %v648, %v650
        %v653 = vmax.f32 %v651, 0.0
        %v654 = vmax.f32 %v652, 0.0
        %v655 = vstv %s644
        %v656 = vmul.f32 %v655, %v653
        %v657 = vmul.f32 %v655, %v654
        %v658 = vadd.f32 %v642, %v656
        %v659 = vadd.f32 %v643, %v657
        %s660 = sld [smem:[#allocation8 + $0x14]]
        %s661 = sld [smem:[#allocation4 + $0x14]]
        %v662 = vstv %s661
        %v663 = vmul.f32 %v662, %v338
        %v664 = vmul.f32 %v662, %v339
        %s665 = sld [smem:[#allocation6 + $0x14]]
        %v666 = vstv %s665
        %v667 = vadd.f32 %v663, %v666
        %v668 = vadd.f32 %v664, %v666
        %v669 = vmax.f32 %v667, 0.0
        %v670 = vmax.f32 %v668, 0.0
        %v671 = vstv %s660
        %v672 = vmul.f32 %v671, %v669
        %v673 = vmul.f32 %v671, %v670
        %v674 = vadd.f32 %v658, %v672
        %v675 = vadd.f32 %v659, %v673
        %s676 = sld [smem:[#allocation8 + $0x15]]
        %s677 = sld [smem:[#allocation4 + $0x15]]
        %v678 = vstv %s677
        %v679 = vmul.f32 %v678, %v338
        %v680 = vmul.f32 %v678, %v339
        %s681 = sld [smem:[#allocation6 + $0x15]]
        %v682 = vstv %s681
        %v683 = vadd.f32 %v679, %v682
        %v684 = vadd.f32 %v680, %v682
        %v685 = vmax.f32 %v683, 0.0
        %v686 = vmax.f32 %v684, 0.0
        %v687 = vstv %s676
        %v688 = vmul.f32 %v687, %v685
        %v689 = vmul.f32 %v687, %v686
        %v690 = vadd.f32 %v674, %v688
        %v691 = vadd.f32 %v675, %v689
        %s692 = sld [smem:[#allocation8 + $0x16]]
        %s693 = sld [smem:[#allocation4 + $0x16]]
        %v694 = vstv %s693
        %v695 = vmul.f32 %v694, %v338
        %v696 = vmul.f32 %v694, %v339
        %s697 = sld [smem:[#allocation6 + $0x16]]
        %v698 = vstv %s697
        %v699 = vadd.f32 %v695, %v698
        %v700 = vadd.f32 %v696, %v698
        %v701 = vmax.f32 %v699, 0.0
        %v702 = vmax.f32 %v700, 0.0
        %v703 = vstv %s692
        %v704 = vmul.f32 %v703, %v701
        %v705 = vmul.f32 %v703, %v702
        %v706 = vadd.f32 %v690, %v704
        %v707 = vadd.f32 %v691, %v705
        %s708 = sld [smem:[#allocation8 + $0x17]]
        %s709 = sld [smem:[#allocation4 + $0x17]]
        %v710 = vstv %s709
        %v711 = vmul.f32 %v710, %v338
        %v712 = vmul.f32 %v710, %v339
        %s713 = sld [smem:[#allocation6 + $0x17]]
        %v714 = vstv %s713
        %v715 = vadd.f32 %v711, %v714
        %v716 = vadd.f32 %v712, %v714
        %v717 = vmax.f32 %v715, 0.0
        %v718 = vmax.f32 %v716, 0.0
        %v719 = vstv %s708
        %v720 = vmul.f32 %v719, %v717
        %v721 = vmul.f32 %v719, %v718
        %v722 = vadd.f32 %v706, %v720
        %v723 = vadd.f32 %v707, %v721
        %s724 = sld [smem:[#allocation8 + $0x18]]
        %s725 = sld [smem:[#allocation4 + $0x18]]
        %v726 = vstv %s725
        %v727 = vmul.f32 %v726, %v338
        %v728 = vmul.f32 %v726, %v339
        %s729 = sld [smem:[#allocation6 + $0x18]]
        %v730 = vstv %s729
        %v731 = vadd.f32 %v727, %v730
        %v732 = vadd.f32 %v728, %v730
        %v733 = vmax.f32 %v731, 0.0
        %v734 = vmax.f32 %v732, 0.0
        %v735 = vstv %s724
        %v736 = vmul.f32 %v735, %v733
        %v737 = vmul.f32 %v735, %v734
        %v738 = vadd.f32 %v722, %v736
        %v739 = vadd.f32 %v723, %v737
        %s740 = sld [smem:[#allocation8 + $0x19]]
        %s741 = sld [smem:[#allocation4 + $0x19]]
        %v742 = vstv %s741
        %v743 = vmul.f32 %v742, %v338
        %v744 = vmul.f32 %v742, %v339
        %s745 = sld [smem:[#allocation6 + $0x19]]
        %v746 = vstv %s745
        %v747 = vadd.f32 %v743, %v746
        %v748 = vadd.f32 %v744, %v746
        %v749 = vmax.f32 %v747, 0.0
        %v750 = vmax.f32 %v748, 0.0
        %v751 = vstv %s740
        %v752 = vmul.f32 %v751, %v749
        %v753 = vmul.f32 %v751, %v750
        %v754 = vadd.f32 %v738, %v752
        %v755 = vadd.f32 %v739, %v753
        %s756 = sld [smem:[#allocation8 + $0x1a]]
        %s757 = sld [smem:[#allocation4 + $0x1a]]
        %v758 = vstv %s757
        %v759 = vmul.f32 %v758, %v338
        %v760 = vmul.f32 %v758, %v339
        %s761 = sld [smem:[#allocation6 + $0x1a]]
        %v762 = vstv %s761
        %v763 = vadd.f32 %v759, %v762
        %v764 = vadd.f32 %v760, %v762
        %v765 = vmax.f32 %v763, 0.0
        %v766 = vmax.f32 %v764, 0.0
        %v767 = vstv %s756
        %v768 = vmul.f32 %v767, %v765
        %v769 = vmul.f32 %v767, %v766
        %v770 = vadd.f32 %v754, %v768
        %v771 = vadd.f32 %v755, %v769
        %s772 = sld [smem:[#allocation8 + $0x1b]]
        %s773 = sld [smem:[#allocation4 + $0x1b]]
        %v774 = vstv %s773
        %v775 = vmul.f32 %v774, %v338
        %v776 = vmul.f32 %v774, %v339
        %s777 = sld [smem:[#allocation6 + $0x1b]]
        %v778 = vstv %s777
        %v779 = vadd.f32 %v775, %v778
        %v780 = vadd.f32 %v776, %v778
        %v781 = vmax.f32 %v779, 0.0
        %v782 = vmax.f32 %v780, 0.0
        %v783 = vstv %s772
        %v784 = vmul.f32 %v783, %v781
        %v785 = vmul.f32 %v783, %v782
        %v786 = vadd.f32 %v770, %v784
        %v787 = vadd.f32 %v771, %v785
        %s788 = sld [smem:[#allocation8 + $0x1c]]
        %s789 = sld [smem:[#allocation4 + $0x1c]]
        %v790 = vstv %s789
        %v791 = vmul.f32 %v790, %v338
        %v792 = vmul.f32 %v790, %v339
        %s793 = sld [smem:[#allocation6 + $0x1c]]
        %v794 = vstv %s793
        %v795 = vadd.f32 %v791, %v794
        %v796 = vadd.f32 %v792, %v794
        %v797 = vmax.f32 %v795, 0.0
        %v798 = vmax.f32 %v796, 0.0
        %v799 = vstv %s788
        %v800 = vmul.f32 %v799, %v797
        %v801 = vmul.f32 %v799, %v798
        %v802 = vadd.f32 %v786, %v800
        %v803 = vadd.f32 %v787, %v801
        %s804 = sld [smem:[#allocation8 + $0x1d]]
        %s805 = sld [smem:[#allocation4 + $0x1d]]
        %v806 = vstv %s805
        %v807 = vmul.f32 %v806, %v338
        %v808 = vmul.f32 %v806, %v339
        %s809 = sld [smem:[#allocation6 + $0x1d]]
        %v810 = vstv %s809
        %v811 = vadd.f32 %v807, %v810
        %v812 = vadd.f32 %v808, %v810
        %v813 = vmax.f32 %v811, 0.0
        %v814 = vmax.f32 %v812, 0.0
        %v815 = vstv %s804
        %v816 = vmul.f32 %v815, %v813
        %v817 = vmul.f32 %v815, %v814
        %v818 = vadd.f32 %v802, %v816
        %v819 = vadd.f32 %v803, %v817
        %s820 = sld [smem:[#allocation8 + $0x1e]]
        %s821 = sld [smem:[#allocation4 + $0x1e]]
        %v822 = vstv %s821
        %v823 = vmul.f32 %v822, %v338
        %v824 = vmul.f32 %v822, %v339
        %s825 = sld [smem:[#allocation6 + $0x1e]]
        %v826 = vstv %s825
        %v827 = vadd.f32 %v823, %v826
        %v828 = vadd.f32 %v824, %v826
        %v829 = vmax.f32 %v827, 0.0
        %v830 = vmax.f32 %v828, 0.0
        %v831 = vstv %s820
        %v832 = vmul.f32 %v831, %v829
        %v833 = vmul.f32 %v831, %v830
        %v834 = vadd.f32 %v818, %v832
        %v835 = vadd.f32 %v819, %v833
        %s836 = sld [smem:[#allocation8 + $0x1f]]
        %s837 = sld [smem:[#allocation4 + $0x1f]]
        %v838 = vstv %s837
        %v839 = vmul.f32 %v838, %v338
        %v840 = vmul.f32 %v838, %v339
        %s841 = sld [smem:[#allocation6 + $0x1f]]
        %v842 = vstv %s841
        %v843 = vadd.f32 %v839, %v842
        %v844 = vadd.f32 %v840, %v842
        %v845 = vmax.f32 %v843, 0.0
        %v846 = vmax.f32 %v844, 0.0
        %v847 = vstv %s836
        %v848 = vmul.f32 %v847, %v845
        %v849 = vmul.f32 %v847, %v846
        %v850 = vadd.f32 %v834, %v848
        %v851 = vadd.f32 %v835, %v849
        %s852 = sld [smem:[#allocation3]]
        %v853 = vstv %s852
        %v854 = vadd.f32 %v850, %v853
        %v855 = vadd.f32 %v851, %v853
        %856 = vst [vmem:[%s330] sm:$0xff] %v854
        %857 = vst [vmem:[%s330 + $0x8] sm:$0xff] %v855
        %s858 = smul.u32 2, %s26
        %p859 = scmp.lt.s32.totalorder %s25, 1
        %s860 = scalar_select %p859, %s25, 1
        %p861 = scmp.lt.s32.totalorder %s858, 1
        %s862 = scalar_select %p861, %s858, 1
        %s863 = smul.addr %s860, 2
        %s864 = sadd.s32 %s862, %s863
        %s865 = smul.addr %s864, 8
        %s866 = scalar_lea.vmem %s6, %s865
        // Predicated region
        $region57: #{vsmodel_forward.3} parent=43 // pred_check
          %p867 = pneg %p186
        $region58: #{vsmodel_forward.3} parent=43 // pred_check_branch
          %869 = sbr.rel (%p867) target = $region60
        $region59: #{vsmodel_forward.3} parent=43 // pred_region
          %s870 = smul.u32 2, %s26
        $region60: #{vsmodel_forward.3} parent=43 // pred_fallthru
          _
      $region44: #{vsmodel_forward.3} parent=5 // pred_fallthru
        _
      %p871 = scmp.le.s32.totalorder 2, %s16
      // Predicated region
      $region61: #{vsmodel_forward.3} parent=5 // pred_check
        %p872 = pneg %p871
      $region62: #{vsmodel_forward.3} parent=5 // pred_check_branch
        %874 = sbr.rel (%p872) target = $region64
      $region63: #{vsmodel_forward.3} parent=5 // pred_region
        %s875 = ssub.s32 %s16, 2
        // Predicated region
        $region65: #{vsmodel_forward.3} parent=63 // pred_check
          %p876 = pneg %p192
        $region66: #{vsmodel_forward.3} parent=63 // pred_check_branch
          %878 = sbr.rel (%p876) target = $region68
        $region67: #{vsmodel_forward.3} parent=63 // pred_region
          %s879 = smul.u32 2, %s28
          %p880 = scmp.lt.s32.totalorder %s27, 1
          %s881 = scalar_select %p880, %s27, 1
          %p882 = scmp.lt.s32.totalorder %s879, 1
          %s883 = scalar_select %p882, %s879, 1
          %s884 = smul.addr %s881, 2
          %s885 = sadd.s32 %s883, %s884
          %s886 = smul.addr %s885, 8
          %s887 = scalar_lea.vmem %s6, %s886
        $region68: #{vsmodel_forward.3} parent=63 // pred_fallthru
          _
      $region64: #{vsmodel_forward.3} parent=5 // pred_fallthru
        _
    $region6: #{vsmodel_forward.3} parent=1 // loop_footer
      %s20 = sadd.s32 1, %s16
    $region7: #{vsmodel_forward.3} parent=1 // loop_footer_branch
      %15 = sbr.rel target = $region3
    $region8: #{vsmodel_forward.3} parent=1 // loop_exit
      _
    %888 = vsyncpa [#allocation5], 1
    %s889 = scalar_lea.sflag [#allocation5], 1
    %890 = vsyncpa %s889, 1
    %891 = vsyncpa [#allocation7], 1

</llo_original>
